<compile_context>
chip_gen: v7x
topology: tpu7x:2x2x1
jax: 0.10.0
libtpu: 0.0.40
codegen_flags: <defaults>
</compile_context>

<pallas_src>
import jax
import jax.numpy as jnp
from jax import lax
from jax.experimental import pallas as pl
from jax.experimental.pallas import tpu as pltpu

EPS = 1e-5


def basic_block_fp_kernel(xpad_ref, w9_ref, wpw_ref, p_ref, out_ref):
    """One (batch, row-tile) block per grid step.

    xpad_ref : (1, TH+2, Wp+2, Cp) f32   (x + b11), zero padded, with halo rows
    w9_ref   : (9*Cp, Cp)          bf16  3x3 weights, tap-major, (K=9*Cin, Cout)
    wpw_ref  : (Cp, Cp)            bf16  1x1 weights, (Cin, Cout)
    p_ref    : (7, Cp)             f32   folded per-channel constants
    out_ref  : (1, TH, Wp, Cp)     f32
    """
    TH, Wp, Cp = out_ref.shape[1], out_ref.shape[2], out_ref.shape[3]
    M = TH * Wp

    # Per-channel constants as (1, Cp) rows -> broadcast over (M, Cp).
    p = p_ref[...]
    scale1, c1, alpha1 = p[0:1, :], p[1:2, :], p[2:3, :]
    scale2, c2, alpha2 = p[3:4, :], p[4:5, :], p[5:6, :]
    b23 = p[6:7, :]

    # ---- binary_3x3 as ONE K=9*Cp rank-2 matmul (im2col on the lane axis) ---
    # Slices are read directly from the VMEM ref; Wp % 8 == 0 makes the
    # (TH, Wp, Cp) -> (M, Cp) reshape a free shape-cast.
    patches = jnp.concatenate(
        [xpad_ref[0, dy:dy + TH, dx:dx + Wp, :]
             .reshape(M, Cp).astype(jnp.bfloat16)
         for dy in range(3) for dx in range(3)],
        axis=-1)                                                # (M, 9*Cp) bf16
    acc = jnp.dot(patches, w9_ref[...],
                  preferred_element_type=jnp.float32)           # (M, Cp) f32

    # Residual comes from the interior of the padded tile (== x + b11); the
    # -b11 correction is algebraically folded into c1.
    interior = xpad_ref[0, 1:TH + 1, 1:Wp + 1, :].reshape(M, Cp)   # f32

    # bn1 + residual + move12 (folded) -> prelu1
    u_pre = interior + acc * scale1 + c1
    u = jnp.where(u_pre >= 0.0, u_pre, alpha1 * u_pre)

    # binary_pw (1x1) + bn2 + residual + move13/move21/move22 (all folded)
    pw = jnp.dot(u.astype(jnp.bfloat16), wpw_ref[...],
                 preferred_element_type=jnp.float32)            # (M, Cp) f32
    z = pw * scale2 + u + c2
    out = jnp.where(z >= 0.0, z, alpha2 * z) + b23              # prelu2 + move23

    out_ref[0] = out.reshape(TH, Wp, Cp)


def _choose_row_tile(H, Wp, Cp, budget_bytes=6 * 1024 * 1024):
    """Largest divisor of H whose per-step VMEM footprint fits the budget."""
    best = 1
    for th in range(1, H + 1):
        if H % th:
            continue
        tile_bytes = (2 * (th + 2) * (Wp + 2) * Cp * 4   # double-buffered input
                      + 9 * th * Wp * Cp * 2             # im2col patches (bf16)
                      + 5 * th * Wp * Cp * 4)            # f32 temporaries
        if tile_bytes <= budget_bytes:
            best = th
    return best


def basic_block_fp(x_nchw, params):
    """Wrapper: NCHW in / NCHW out, matching the PyTorch module interface.

    The NCHW<->NHWC transposes are kept only for PyTorch interface parity; a
    model kept NHWC end-to-end would drop them.
    """
    x = jnp.transpose(x_nchw, (0, 2, 3, 1)).astype(jnp.float32)   # -> NHWC
    N, H, W, C = x.shape
    Cp = ((C + 127) // 128) * 128       # lane-dense channel count
    Wp = ((W + 7) // 8) * 8             # sublane-aligned width (free reshapes)
    pad_c, pad_w = Cp - C, Wp - W

    def padc(v):
        return jnp.pad(v.astype(jnp.float32), (0, pad_c))

    # Fold eval-mode BatchNorm into per-channel scale/shift.
    scale1 = params['gamma1'] / jnp.sqrt(params['var1'] + EPS)
    shift1 = params['beta1'] - params['mean1'] * scale1
    scale2 = params['gamma2'] / jnp.sqrt(params['var2'] + EPS)
    shift2 = params['beta2'] - params['mean2'] * scale2

    # Fold LearnableBias adds:
    #   c1 = shift1 + b12 - b11      (interior tile already contains x + b11)
    #   c2 = scale2*(Wpw·(b13+b21)) + shift2 + b13 + b22
    c1 = shift1 + params['b12'] - params['b11']
    wpw_oi = params['wpw'][:, :, 0, 0]                     # (Cout, Cin)
    wc = wpw_oi @ (params['b13'] + params['b21'])          # (C,)
    c2 = scale2 * wc + shift2 + params['b13'] + params['b22']

    p = jnp.stack([padc(scale1), padc(c1), padc(params['alpha1']),
                   padc(scale2), padc(c2), padc(params['alpha2']),
                   padc(params['b23'])], axis=0)           # (7, Cp) f32

    # 3x3 weights: torch (Cout,Cin,3,3) -> (kh,kw,Cin,Cout) -> (9*Cp, Cp) bf16.
    w3t = jnp.transpose(params['w3x3'], (2, 3, 1, 0))
    w3t = jnp.pad(w3t, ((0, 0), (0, 0), (0, pad_c), (0, pad_c)))
    w9 = w3t.reshape(9 * Cp, Cp).astype(jnp.bfloat16)
    # 1x1 weights: (Cin, Cout) bf16.
    wpw = jnp.pad(jnp.transpose(wpw_oi, (1, 0)),
                  ((0, pad_c), (0, pad_c))).astype(jnp.bfloat16)

    # move11 applied before zero padding (the conv pads x+b11, not x).
    xb = x + params['b11'][None, None, None, :]
    xb = jnp.pad(xb, ((0, 0), (0, 0), (0, 0), (0, pad_c)))          # channel pad
    xpad = jnp.pad(xb, ((0, 0), (1, 1), (1, 1 + pad_w), (0, 0)))    # (N,H+2,Wp+2,Cp)

    TH = _choose_row_tile(H, Wp, Cp)
    nrt = H // TH
    if nrt > 1:
        # Make each row-tile (with its 1-row halos) contiguous so plain Blocked
        # BlockSpecs can fetch it (only 2 duplicated rows per tile).
        idx = (jnp.arange(nrt)[:, None] * TH
               + jnp.arange(TH + 2)[None, :]).reshape(-1)
        xhalo = jnp.take(xpad, idx, axis=1)       # (N, nrt*(TH+2), Wp+2, Cp)
    else:
        xhalo = xpad                              # (N, H+2, Wp+2, Cp), TH == H

    # Weight/param index_maps are constant -> fetched once (not re-DMA'd).
    out = pl.pallas_call(
        basic_block_fp_kernel,
        out_shape=jax.ShapeDtypeStruct((N, H, Wp, Cp), jnp.float32),
        grid=(N, nrt),
        in_specs=[
            pl.BlockSpec((1, TH + 2, Wp + 2, Cp), lambda n, r: (n, r, 0, 0)),
            pl.BlockSpec((9 * Cp, Cp), lambda n, r: (0, 0)),
            pl.BlockSpec((Cp, Cp), lambda n, r: (0, 0)),
            pl.BlockSpec((7, Cp), lambda n, r: (0, 0)),
        ],
        out_specs=pl.BlockSpec((1, TH, Wp, Cp), lambda n, r: (n, r, 0, 0)),
        compiler_params=pltpu.CompilerParams(
            dimension_semantics=("parallel", "parallel"),
            vmem_limit_bytes=32 * 1024 * 1024),
    )(xhalo, w9, wpw, p)

    return jnp.transpose(out[:, :, :W, :C], (0, 3, 1, 2))      # drop pad, -> NCHW


def ref_forward(x, params):
    """Pure-JAX (NCHW, f32) reference mirroring the PyTorch forward (eval BN)."""
    def bc(v):
        return v[None, :, None, None]

    def bn(y, g, b, m, v):
        return (y - bc(m)) / jnp.sqrt(bc(v) + EPS) * bc(g) + bc(b)

    def prelu(y, a):
        return jnp.where(y >= 0.0, y, bc(a) * y)

    out1 = x + bc(params['b11'])
    out1 = lax.conv_general_dilated(out1, params['w3x3'], (1, 1),
                                    ((1, 1), (1, 1)),
                                    dimension_numbers=('NCHW', 'OIHW', 'NCHW'))
    out1 = bn(out1, params['gamma1'], params['beta1'],
              params['mean1'], params['var1'])
    out1 = x + out1
    out1 = out1 + bc(params['b12'])
    out1 = prelu(out1, params['alpha1'])
    out1 = out1 + bc(params['b13'])

    out2 = out1 + bc(params['b21'])
    out2 = lax.conv_general_dilated(out2, params['wpw'], (1, 1),
                                    ((0, 0), (0, 0)),
                                    dimension_numbers=('NCHW', 'OIHW', 'NCHW'))
    out2 = bn(out2, params['gamma2'], params['beta2'],
              params['mean2'], params['var2'])
    out2 = out2 + out1
    out2 = out2 + bc(params['b22'])
    out2 = prelu(out2, params['alpha2'])
    out2 = out2 + bc(params['b23'])
    return out2


def make_params(key, inplanes):
    """Deterministic synthetic parameters (shapes follow the module __init__)."""
    C = inplanes
    ks = jax.random.split(key, 20)
    f32 = jnp.float32
    return {
        'b11':    0.1 * jax.random.normal(ks[0], (C,), f32),
        'w3x3':   0.2 * jax.random.normal(ks[1], (C, C, 3, 3), f32),
        'gamma1': 1.0 + 0.1 * jax.random.normal(ks[2], (C,), f32),
        'beta1':  0.1 * jax.random.normal(ks[3], (C,), f32),
        'mean1':  0.1 * jax.random.normal(ks[4], (C,), f32),
        'var1':   0.5 + jnp.abs(jax.random.normal(ks[5], (C,), f32)),
        'b12':    0.1 * jax.random.normal(ks[6], (C,), f32),
        'alpha1': 0.25 + 0.05 * jax.random.normal(ks[7], (C,), f32),
        'b13':    0.1 * jax.random.normal(ks[8], (C,), f32),
        'b21':    0.1 * jax.random.normal(ks[9], (C,), f32),
        'wpw':    0.2 * jax.random.normal(ks[10], (C, C, 1, 1), f32),
        'gamma2': 1.0 + 0.1 * jax.random.normal(ks[11], (C,), f32),
        'beta2':  0.1 * jax.random.normal(ks[12], (C,), f32),
        'mean2':  0.1 * jax.random.normal(ks[13], (C,), f32),
        'var2':   0.5 + jnp.abs(jax.random.normal(ks[14], (C,), f32)),
        'b22':    0.1 * jax.random.normal(ks[15], (C,), f32),
        'alpha2': 0.25 + 0.05 * jax.random.normal(ks[16], (C,), f32),
        'b23':    0.1 * jax.random.normal(ks[17], (C,), f32),
    }


if __name__ == "__main__":
    key = jax.random.PRNGKey(0)
    kx, kp = jax.random.split(key)

    N, C, H, W = 2, 4, 16, 16            # inplanes == planes == 4, stride == 1
    x = jax.random.normal(kx, (N, C, H, W), jnp.float32)
    params = make_params(kp, C)

    out = jax.block_until_ready(basic_block_fp(x, params))
    ref = jax.block_until_ready(ref_forward(x, params))

    assert out.shape == (N, C, H, W)
    # Matmul operands are bf16 on the MXU (f32 accumulation / BN / residual /
    # PReLU), so the tolerance vs. the pure-f32 reference is bf16-level.
    assert jnp.allclose(out, ref, atol=1e-1, rtol=1e-2), (
        float(jnp.max(jnp.abs(out - ref))))

    print("KERNEL_OK")
</pallas_src>

<mosaic_0001>
module attributes {stable_mosaic.version = 11 : i64} {
  func.func @basic_block_fp_kernel(%arg0: i32, %arg1: i32, %arg2: memref<1x18x18x128xf32, #tpu.memory_space<vmem>>, %arg3: memref<1152x128xbf16, #tpu.memory_space<vmem>>, %arg4: memref<128x128xbf16, #tpu.memory_space<vmem>>, %arg5: memref<7x128xf32, #tpu.memory_space<vmem>>, %arg6: memref<1x16x16x128xf32, #tpu.memory_space<vmem>>) attributes {dimension_semantics = [#tpu.dimension_semantics<parallel>, #tpu.dimension_semantics<parallel>], iteration_bounds = array<i64: 2, 1>, scalar_prefetch = 0 : i64, scratch_operands = 0 : i64, tpu.core_type = #tpu.core_type<tc>, window_params = [{transform_indices = @transform_0, window_bounds = array<i64: 1, 18, 18, 128>}, {pipeline_mode = #tpu.pipeline_mode<synchronous>, transform_indices = @transform_1, window_bounds = array<i64: 1152, 128>}, {pipeline_mode = #tpu.pipeline_mode<synchronous>, transform_indices = @transform_2, window_bounds = array<i64: 128, 128>}, {pipeline_mode = #tpu.pipeline_mode<synchronous>, transform_indices = @transform_3, window_bounds = array<i64: 7, 128>}, {transform_indices = @transform_4, window_bounds = array<i64: 1, 16, 16, 128>}]} {
    %c0 = arith.constant 0 : index
    %c0_0 = arith.constant 0 : index
    %0 = vector.load %arg5[%c0, %c0_0] : memref<7x128xf32, #tpu.memory_space<vmem>>, vector<7x128xf32>
    %1 = vector.extract_strided_slice %0 {offsets = [0, 0], sizes = [1, 128], strides = [1, 1]} : vector<7x128xf32> to vector<1x128xf32>
    %2 = vector.extract_strided_slice %0 {offsets = [1, 0], sizes = [1, 128], strides = [1, 1]} : vector<7x128xf32> to vector<1x128xf32>
    %3 = vector.extract_strided_slice %0 {offsets = [2, 0], sizes = [1, 128], strides = [1, 1]} : vector<7x128xf32> to vector<1x128xf32>
    %4 = vector.extract_strided_slice %0 {offsets = [3, 0], sizes = [1, 128], strides = [1, 1]} : vector<7x128xf32> to vector<1x128xf32>
    %5 = vector.extract_strided_slice %0 {offsets = [4, 0], sizes = [1, 128], strides = [1, 1]} : vector<7x128xf32> to vector<1x128xf32>
    %6 = vector.extract_strided_slice %0 {offsets = [5, 0], sizes = [1, 128], strides = [1, 1]} : vector<7x128xf32> to vector<1x128xf32>
    %7 = vector.extract_strided_slice %0 {offsets = [6, 0], sizes = [1, 128], strides = [1, 1]} : vector<7x128xf32> to vector<1x128xf32>
    %c0_1 = arith.constant 0 : index
    %c0_2 = arith.constant 0 : index
    %c0_3 = arith.constant 0 : index
    %c0_4 = arith.constant 0 : index
    %8 = vector.load %arg2[%c0_1, %c0_2, %c0_3, %c0_4] : memref<1x18x18x128xf32, #tpu.memory_space<vmem>>, vector<1x16x16x128xf32>
    %9 = vector.shape_cast %8 : vector<1x16x16x128xf32> to vector<16x16x128xf32>
    %10 = vector.shape_cast %9 : vector<16x16x128xf32> to vector<256x128xf32>
    %11 = arith.truncf %10 : vector<256x128xf32> to vector<256x128xbf16>
    %c0_5 = arith.constant 0 : index
    %c0_6 = arith.constant 0 : index
    %c1 = arith.constant 1 : index
    %c0_7 = arith.constant 0 : index
    %12 = vector.load %arg2[%c0_5, %c0_6, %c1, %c0_7] : memref<1x18x18x128xf32, #tpu.memory_space<vmem>>, vector<1x16x16x128xf32>
    %13 = vector.shape_cast %12 : vector<1x16x16x128xf32> to vector<16x16x128xf32>
    %14 = vector.shape_cast %13 : vector<16x16x128xf32> to vector<256x128xf32>
    %15 = arith.truncf %14 : vector<256x128xf32> to vector<256x128xbf16>
    %c0_8 = arith.constant 0 : index
    %c0_9 = arith.constant 0 : index
    %c2 = arith.constant 2 : index
    %c0_10 = arith.constant 0 : index
    %16 = vector.load %arg2[%c0_8, %c0_9, %c2, %c0_10] : memref<1x18x18x128xf32, #tpu.memory_space<vmem>>, vector<1x16x16x128xf32>
    %17 = vector.shape_cast %16 : vector<1x16x16x128xf32> to vector<16x16x128xf32>
    %18 = vector.shape_cast %17 : vector<16x16x128xf32> to vector<256x128xf32>
    %19 = arith.truncf %18 : vector<256x128xf32> to vector<256x128xbf16>
    %c0_11 = arith.constant 0 : index
    %c1_12 = arith.constant 1 : index
    %c0_13 = arith.constant 0 : index
    %c0_14 = arith.constant 0 : index
    %20 = vector.load %arg2[%c0_11, %c1_12, %c0_13, %c0_14] : memref<1x18x18x128xf32, #tpu.memory_space<vmem>>, vector<1x16x16x128xf32>
    %21 = vector.shape_cast %20 : vector<1x16x16x128xf32> to vector<16x16x128xf32>
    %22 = vector.shape_cast %21 : vector<16x16x128xf32> to vector<256x128xf32>
    %23 = arith.truncf %22 : vector<256x128xf32> to vector<256x128xbf16>
    %c0_15 = arith.constant 0 : index
    %c1_16 = arith.constant 1 : index
    %c1_17 = arith.constant 1 : index
    %c0_18 = arith.constant 0 : index
    %24 = vector.load %arg2[%c0_15, %c1_16, %c1_17, %c0_18] : memref<1x18x18x128xf32, #tpu.memory_space<vmem>>, vector<1x16x16x128xf32>
    %25 = vector.shape_cast %24 : vector<1x16x16x128xf32> to vector<16x16x128xf32>
    %26 = vector.shape_cast %25 : vector<16x16x128xf32> to vector<256x128xf32>
    %27 = arith.truncf %26 : vector<256x128xf32> to vector<256x128xbf16>
    %c0_19 = arith.constant 0 : index
    %c1_20 = arith.constant 1 : index
    %c2_21 = arith.constant 2 : index
    %c0_22 = arith.constant 0 : index
    %28 = vector.load %arg2[%c0_19, %c1_20, %c2_21, %c0_22] : memref<1x18x18x128xf32, #tpu.memory_space<vmem>>, vector<1x16x16x128xf32>
    %29 = vector.shape_cast %28 : vector<1x16x16x128xf32> to vector<16x16x128xf32>
    %30 = vector.shape_cast %29 : vector<16x16x128xf32> to vector<256x128xf32>
    %31 = arith.truncf %30 : vector<256x128xf32> to vector<256x128xbf16>
    %c0_23 = arith.constant 0 : index
    %c2_24 = arith.constant 2 : index
    %c0_25 = arith.constant 0 : index
    %c0_26 = arith.constant 0 : index
    %32 = vector.load %arg2[%c0_23, %c2_24, %c0_25, %c0_26] : memref<1x18x18x128xf32, #tpu.memory_space<vmem>>, vector<1x16x16x128xf32>
    %33 = vector.shape_cast %32 : vector<1x16x16x128xf32> to vector<16x16x128xf32>
    %34 = vector.shape_cast %33 : vector<16x16x128xf32> to vector<256x128xf32>
    %35 = arith.truncf %34 : vector<256x128xf32> to vector<256x128xbf16>
    %c0_27 = arith.constant 0 : index
    %c2_28 = arith.constant 2 : index
    %c1_29 = arith.constant 1 : index
    %c0_30 = arith.constant 0 : index
    %36 = vector.load %arg2[%c0_27, %c2_28, %c1_29, %c0_30] : memref<1x18x18x128xf32, #tpu.memory_space<vmem>>, vector<1x16x16x128xf32>
    %37 = vector.shape_cast %36 : vector<1x16x16x128xf32> to vector<16x16x128xf32>
    %38 = vector.shape_cast %37 : vector<16x16x128xf32> to vector<256x128xf32>
    %39 = arith.truncf %38 : vector<256x128xf32> to vector<256x128xbf16>
    %c0_31 = arith.constant 0 : index
    %c2_32 = arith.constant 2 : index
    %c2_33 = arith.constant 2 : index
    %c0_34 = arith.constant 0 : index
    %40 = vector.load %arg2[%c0_31, %c2_32, %c2_33, %c0_34] : memref<1x18x18x128xf32, #tpu.memory_space<vmem>>, vector<1x16x16x128xf32>
    %41 = vector.shape_cast %40 : vector<1x16x16x128xf32> to vector<16x16x128xf32>
    %42 = vector.shape_cast %41 : vector<16x16x128xf32> to vector<256x128xf32>
    %43 = arith.truncf %42 : vector<256x128xf32> to vector<256x128xbf16>
    %44 = tpu.concatenate %11, %15, %19, %23, %27, %31, %35, %39, %43 in 1 : vector<256x128xbf16>, vector<256x128xbf16>, vector<256x128xbf16>, vector<256x128xbf16>, vector<256x128xbf16>, vector<256x128xbf16>, vector<256x128xbf16>, vector<256x128xbf16>, vector<256x128xbf16> -> vector<256x1152xbf16>
    %c0_35 = arith.constant 0 : index
    %c0_36 = arith.constant 0 : index
    %45 = vector.load %arg3[%c0_35, %c0_36] : memref<1152x128xbf16, #tpu.memory_space<vmem>>, vector<1152x128xbf16>
    %cst = arith.constant dense<0.000000e+00> : vector<256x128xf32>
    %46 = tpu.matmul %44, %45, %cst {dimension_numbers = #tpu.dot_dimension_numbers<[1], [0], [0], [1], [0, 0, 1, 1], [], []>} : vector<256x1152xbf16>, vector<1152x128xbf16>, vector<256x128xf32> -> vector<256x128xf32>
    %c0_37 = arith.constant 0 : index
    %c1_38 = arith.constant 1 : index
    %c1_39 = arith.constant 1 : index
    %c0_40 = arith.constant 0 : index
    %47 = vector.load %arg2[%c0_37, %c1_38, %c1_39, %c0_40] : memref<1x18x18x128xf32, #tpu.memory_space<vmem>>, vector<1x16x16x128xf32>
    %48 = vector.shape_cast %47 : vector<1x16x16x128xf32> to vector<16x16x128xf32>
    %49 = vector.shape_cast %48 : vector<16x16x128xf32> to vector<256x128xf32>
    %50 = vector.broadcast %1 : vector<1x128xf32> to vector<256x128xf32>
    %51 = arith.mulf %46, %50 : vector<256x128xf32>
    %52 = arith.addf %49, %51 : vector<256x128xf32>
    %53 = vector.broadcast %2 : vector<1x128xf32> to vector<256x128xf32>
    %54 = arith.addf %52, %53 : vector<256x128xf32>
    %cst_41 = arith.constant 0.000000e+00 : f32
    %55 = vector.broadcast %cst_41 : f32 to vector<256x128xf32>
    %56 = arith.cmpf oge, %54, %55 : vector<256x128xf32>
    %57 = vector.broadcast %3 : vector<1x128xf32> to vector<256x128xf32>
    %58 = arith.mulf %57, %54 : vector<256x128xf32>
    %59 = arith.select %56, %54, %58 : vector<256x128xi1>, vector<256x128xf32>
    %60 = arith.truncf %59 : vector<256x128xf32> to vector<256x128xbf16>
    %c0_42 = arith.constant 0 : index
    %c0_43 = arith.constant 0 : index
    %61 = vector.load %arg4[%c0_42, %c0_43] : memref<128x128xbf16, #tpu.memory_space<vmem>>, vector<128x128xbf16>
    %cst_44 = arith.constant dense<0.000000e+00> : vector<256x128xf32>
    %62 = tpu.matmul %60, %61, %cst_44 {dimension_numbers = #tpu.dot_dimension_numbers<[1], [0], [0], [1], [0, 0, 1, 1], [], []>} : vector<256x128xbf16>, vector<128x128xbf16>, vector<256x128xf32> -> vector<256x128xf32>
    %63 = vector.broadcast %4 : vector<1x128xf32> to vector<256x128xf32>
    %64 = arith.mulf %62, %63 : vector<256x128xf32>
    %65 = arith.addf %64, %59 : vector<256x128xf32>
    %66 = vector.broadcast %5 : vector<1x128xf32> to vector<256x128xf32>
    %67 = arith.addf %65, %66 : vector<256x128xf32>
    %cst_45 = arith.constant 0.000000e+00 : f32
    %68 = vector.broadcast %cst_45 : f32 to vector<256x128xf32>
    %69 = arith.cmpf oge, %67, %68 : vector<256x128xf32>
    %70 = vector.broadcast %6 : vector<1x128xf32> to vector<256x128xf32>
    %71 = arith.mulf %70, %67 : vector<256x128xf32>
    %72 = arith.select %69, %67, %71 : vector<256x128xi1>, vector<256x128xf32>
    %73 = vector.broadcast %7 : vector<1x128xf32> to vector<256x128xf32>
    %74 = arith.addf %72, %73 : vector<256x128xf32>
    %75 = vector.shape_cast %74 : vector<256x128xf32> to vector<16x16x128xf32>
    %c0_46 = arith.constant 0 : index
    %c0_47 = arith.constant 0 : index
    %c0_48 = arith.constant 0 : index
    %c0_49 = arith.constant 0 : index
    %76 = vector.load %arg6[%c0_46, %c0_47, %c0_48, %c0_49] : memref<1x16x16x128xf32, #tpu.memory_space<vmem>>, vector<1x16x16x128xf32>
    %77 = vector.shape_cast %76 : vector<1x16x16x128xf32> to vector<16x16x128xf32>
    %78 = vector.shape_cast %75 : vector<16x16x128xf32> to vector<1x16x16x128xf32>
    tpu.vector_store %arg6[%c0_46, %c0_47, %c0_48, %c0_49], %78 {strides = array<i32>} : memref<1x16x16x128xf32, #tpu.memory_space<vmem>>, vector<1x16x16x128xf32>,
    return
  }
  func.func @transform_0(%arg0: i32, %arg1: i32) -> (i32, i32, i32, i32) {
    %c0_i32 = arith.constant 0 : i32
    %c0_i32_0 = arith.constant 0 : i32
    %c0_i32_1 = arith.constant 0 : i32
    return %arg0, %arg1, %c0_i32, %c0_i32_0 : i32, i32, i32, i32
  }
  func.func @transform_1(%arg0: i32, %arg1: i32) -> (i32, i32) {
    %c0_i32 = arith.constant 0 : i32
    %c0_i32_0 = arith.constant 0 : i32
    %c0_i32_1 = arith.constant 0 : i32
    return %c0_i32, %c0_i32_0 : i32, i32
  }
  func.func @transform_2(%arg0: i32, %arg1: i32) -> (i32, i32) {
    %c0_i32 = arith.constant 0 : i32
    %c0_i32_0 = arith.constant 0 : i32
    %c0_i32_1 = arith.constant 0 : i32
    return %c0_i32, %c0_i32_0 : i32, i32
  }
  func.func @transform_3(%arg0: i32, %arg1: i32) -> (i32, i32) {
    %c0_i32 = arith.constant 0 : i32
    %c0_i32_0 = arith.constant 0 : i32
    %c0_i32_1 = arith.constant 0 : i32
    return %c0_i32, %c0_i32_0 : i32, i32
  }
  func.func @transform_4(%arg0: i32, %arg1: i32) -> (i32, i32, i32, i32) {
    %c0_i32 = arith.constant 0 : i32
    %c0_i32_0 = arith.constant 0 : i32
    %c0_i32_1 = arith.constant 0 : i32
    return %arg0, %arg1, %c0_i32, %c0_i32_0 : i32, i32, i32, i32
  }
}

</mosaic_0001>

<llo_original>
// kernel: tpu_custom_call.1
$region0: #{tpu_custom_call.1}
  #allocation0 [shape = 'u32[]', space=smem, size = 0x4, offset = 0x4, fixed_abs, tag = 'smem constant byte address 0x4 - core index']
  #allocation1 [shape = 'u32[144,128]{1,0:T(1,128)}', space=vmem, size = 0x12000, scoped, tag = 'internal scratch']
  %s0 = inlined_call_operand.vmem [shape: f32[2,18,18,128], index: 0, kind: input, shape index: {}]
  %s1 = inlined_call_operand.vmem [shape: bf16[1152,128], index: 1, kind: input, shape index: {}]
  %s2 = inlined_call_operand.vmem [shape: bf16[128,128], index: 2, kind: input, shape index: {}]
  %s3 = inlined_call_operand.vmem [shape: f32[7,128], index: 3, kind: input, shape index: {}]
  %s4 = inlined_call_operand.hbm [shape: f32[2,16,16,128], index: 4, kind: output, shape index: {}]
  %s5 = sld [smem:[#allocation0]]
  $region49: #{tpu_custom_call.1} parent=0
    _
  %s7 = ssub.s32 1, %s5
  %s8 = scalar_select 0, %s7, %s5
  $region1: #{tpu_custom_call.1} parent=0
    #allocation2 [shape = 'u8[262144]{0}', space=vmem, size = 0x40000, scoped, tag = 'output window, operand 0']
    #allocation3 [shape = 's32[2]{0}', space=sflag, size = 0x8, scoped, tag = 'scoped memory for tpu_custom_call.1']
    %9 = vsyncpa [#allocation3], 0
    %s10 = scalar_lea.sflag [#allocation3], 1
    %11 = vsyncpa %s10, 0
    loop: start=0, step=1, limit=4
    $region2: #{tpu_custom_call.1} parent=1 // loop_pre_header
      _
    $region3: #{tpu_custom_call.1} parent=1 // loop_header
      %s13 = sphi 0, %s17
      %p14 = scmp.ge.s32.totalorder %s13, 4
      %s20 = sphi 0, %s32
      %s21 = sphi 0, %s28
      %s22 = sphi 0, %s20
      %s23 = sphi 0, %s21
      %s24 = sphi 0, %s22
      %s25 = sphi 0, %s23
      %s37 = sphi 0, %s39
      %s40 = sphi 0, %s37
      %s41 = sphi 0, %s40
      %s57 = sphi 0, %s41
      %s61 = sphi 0, %s61
      %s63 = sphi 0, %s61
      %s64 = sphi 0, %s63
      %s78 = sphi 0, %s64
      %s82 = sphi 0, %s82
      %s84 = sphi 0, %s82
      %s85 = sphi 0, %s84
      %s99 = sphi 0, %s85
      %s103 = sphi 0, %s103
      %s105 = sphi 0, %s103
      %s106 = sphi 0, %s105
      %s120 = sphi 0, %s106
      %s128 = sphi 0, %s130
      %s131 = sphi 0, %s128
      %s132 = sphi 0, %s131
      %s148 = sphi 0, %s132
    $region4: #{tpu_custom_call.1} parent=1 // loop_header_branch
      %16 = sbr.rel (%p14) target = $region8
    $region5: #{tpu_custom_call.1} parent=1 // loop_body
      %s18 = ssub.s32 %s13, 1
      %s19 = ssub.s32 %s13, 2
      %s26 = sadd.s32 1, %s21
      %p27 = scmp.ge.s32.totalorder %s26, 1
      %s28 = scalar_select %p27, 0, %s26
      %s29 = sadd.s32 1, %s20
      %s30 = scalar_select %p27, %s29, %s20
      %p31 = scmp.ge.s32.totalorder %s30, 2
      %s32 = scalar_select %p31, 0, %s30
      %s33 = ssub.s32 %s20, %s32
      %s34 = ssub.s32 %s21, %s28
      %s35 = sor.u32 %s33, %s34
      %p36 = scmp.eq.s32.totalorder %s35, 0
      %s38 = sadd.s32 %s37, 1
      %s39 = scalar_select %p36, %s37, %s38
      %p42 = pneg %p36
      %p43 = scmp.eq.s32.totalorder %s13, 1
      %p44 = por %p42, %p43
      %p45 = scmp.ne.s32.totalorder %s37, %s40
      %p46 = scmp.eq.s32.totalorder %s13, 0
      %p47 = por %p45, %p46
      %p48 = scmp.ne.s32.totalorder %s37, %s40
      %p49 = scmp.eq.s32.totalorder %s18, 1
      %p50 = por %p48, %p49
      %p51 = scmp.ne.s32.totalorder %s40, %s41
      %p52 = scmp.eq.s32.totalorder %s18, 0
      %p53 = por %p51, %p52
      %p54 = scmp.ne.s32.totalorder %s40, %s41
      %p55 = scmp.eq.s32.totalorder %s19, 1
      %p56 = por %p54, %p55
      %p58 = scmp.ne.s32.totalorder %s41, %s57
      %p59 = scmp.eq.s32.totalorder %s19, 0
      %p60 = por %p58, %p59
      %s62 = sadd.s32 %s61, 1
      %p65 = scmp.eq.s32.totalorder %s13, 1
      %p66 = scmp.ne.s32.totalorder %s61, %s63
      %p67 = scmp.eq.s32.totalorder %s13, 0
      %p68 = por %p66, %p67
      %p69 = scmp.ne.s32.totalorder %s61, %s63
      %p70 = scmp.eq.s32.totalorder %s18, 1
      %p71 = por %p69, %p70
      %p72 = scmp.ne.s32.totalorder %s63, %s64
      %p73 = scmp.eq.s32.totalorder %s18, 0
      %p74 = por %p72, %p73
      %p75 = scmp.ne.s32.totalorder %s63, %s64
      %p76 = scmp.eq.s32.totalorder %s19, 1
      %p77 = por %p75, %p76
      %p79 = scmp.ne.s32.totalorder %s64, %s78
      %p80 = scmp.eq.s32.totalorder %s19, 0
      %p81 = por %p79, %p80
      %s83 = sadd.s32 %s82, 1
      %p86 = scmp.eq.s32.totalorder %s13, 1
      %p87 = scmp.ne.s32.totalorder %s82, %s84
      %p88 = scmp.eq.s32.totalorder %s13, 0
      %p89 = por %p87, %p88
      %p90 = scmp.ne.s32.totalorder %s82, %s84
      %p91 = scmp.eq.s32.totalorder %s18, 1
      %p92 = por %p90, %p91
      %p93 = scmp.ne.s32.totalorder %s84, %s85
      %p94 = scmp.eq.s32.totalorder %s18, 0
      %p95 = por %p93, %p94
      %p96 = scmp.ne.s32.totalorder %s84, %s85
      %p97 = scmp.eq.s32.totalorder %s19, 1
      %p98 = por %p96, %p97
      %p100 = scmp.ne.s32.totalorder %s85, %s99
      %p101 = scmp.eq.s32.totalorder %s19, 0
      %p102 = por %p100, %p101
      %s104 = sadd.s32 %s103, 1
      %p107 = scmp.eq.s32.totalorder %s13, 1
      %p108 = scmp.ne.s32.totalorder %s103, %s105
      %p109 = scmp.eq.s32.totalorder %s13, 0
      %p110 = por %p108, %p109
      %p111 = scmp.ne.s32.totalorder %s103, %s105
      %p112 = scmp.eq.s32.totalorder %s18, 1
      %p113 = por %p111, %p112
      %p114 = scmp.ne.s32.totalorder %s105, %s106
      %p115 = scmp.eq.s32.totalorder %s18, 0
      %p116 = por %p114, %p115
      %p117 = scmp.ne.s32.totalorder %s105, %s106
      %p118 = scmp.eq.s32.totalorder %s19, 1
      %p119 = por %p117, %p118
      %p121 = scmp.ne.s32.totalorder %s106, %s120
      %p122 = scmp.eq.s32.totalorder %s19, 0
      %p123 = por %p121, %p122
      %s124 = ssub.s32 %s20, %s32
      %s125 = ssub.s32 %s21, %s28
      %s126 = sor.u32 %s124, %s125
      %p127 = scmp.eq.s32.totalorder %s126, 0
      %s129 = sadd.s32 %s128, 1
      %s130 = scalar_select %p127, %s128, %s129
      %p133 = pneg %p127
      %p134 = scmp.eq.s32.totalorder %s13, 1
      %p135 = por %p133, %p134
      %p136 = scmp.ne.s32.totalorder %s128, %s131
      %p137 = scmp.eq.s32.totalorder %s13, 0
      %p138 = por %p136, %p137
      %p139 = scmp.ne.s32.totalorder %s128, %s131
      %p140 = scmp.eq.s32.totalorder %s18, 1
      %p141 = por %p139, %p140
      %p142 = scmp.ne.s32.totalorder %s131, %s132
      %p143 = scmp.eq.s32.totalorder %s18, 0
      %p144 = por %p142, %p143
      %p145 = scmp.ne.s32.totalorder %s131, %s132
      %p146 = scmp.eq.s32.totalorder %s19, 1
      %p147 = por %p145, %p146
      %p149 = scmp.ne.s32.totalorder %s132, %s148
      %p150 = scmp.eq.s32.totalorder %s19, 0
      %p151 = por %p149, %p150
      %p152 = scmp.le.s32.totalorder 1, %s13
      %p153 = scmp.lt.s32.totalorder %s13, 3
      %p154 = pnand %p152, %p153
      %p155 = pneg %p154
      // Predicated region
      $region9: #{tpu_custom_call.1} parent=5 // pred_check
        _
      $region10: #{tpu_custom_call.1} parent=5 // pred_check_branch
        %157 = sbr.rel (%p154) target = $region12
      $region11: #{tpu_custom_call.1} parent=5 // pred_region
        %s158 = ssub.s32 %s13, 1
        // Predicated region
        $region13: #{tpu_custom_call.1} parent=11 // pred_check
          %p159 = pneg %p74
        $region14: #{tpu_custom_call.1} parent=11 // pred_check_branch
          %161 = sbr.rel (%p159) target = $region16
        $region15: #{tpu_custom_call.1} parent=11 // pred_region
          _
        $region16: #{tpu_custom_call.1} parent=11 // pred_fallthru
          _
        // Predicated region
        $region17: #{tpu_custom_call.1} parent=11 // pred_check
          %p162 = pneg %p95
        $region18: #{tpu_custom_call.1} parent=11 // pred_check_branch
          %164 = sbr.rel (%p162) target = $region20
        $region19: #{tpu_custom_call.1} parent=11 // pred_region
          _
        $region20: #{tpu_custom_call.1} parent=11 // pred_fallthru
          _
        // Predicated region
        $region21: #{tpu_custom_call.1} parent=11 // pred_check
          %p165 = pneg %p116
        $region22: #{tpu_custom_call.1} parent=11 // pred_check_branch
          %167 = sbr.rel (%p165) target = $region24
        $region23: #{tpu_custom_call.1} parent=11 // pred_region
          _
        $region24: #{tpu_custom_call.1} parent=11 // pred_fallthru
          _
      $region12: #{tpu_custom_call.1} parent=5 // pred_fallthru
        _
      %p168 = scmp.lt.s32.totalorder %s13, 2
      // Predicated region
      $region25: #{tpu_custom_call.1} parent=5 // pred_check
        %p169 = pneg %p168
      $region26: #{tpu_custom_call.1} parent=5 // pred_check_branch
        %171 = sbr.rel (%p169) target = $region28
      $region27: #{tpu_custom_call.1} parent=5 // pred_region
        // Predicated region
        $region29: #{tpu_custom_call.1} parent=27 // pred_check
          %p172 = pneg %p47
        $region30: #{tpu_custom_call.1} parent=27 // pred_check_branch
          %174 = sbr.rel (%p172) target = $region32
        $region31: #{tpu_custom_call.1} parent=27 // pred_region
          %s175 = smul.u32 18, %s21
          %p176 = scmp.lt.s32.totalorder %s20, 1
          %s177 = scalar_select %p176, %s20, 1
          %p178 = scmp.lt.s32.totalorder %s175, 17
          %s179 = scalar_select %p178, %s175, 17
          %s180 = smul.addr %s179, 3
          %s181 = smul.addr %s177, 54
          %s182 = sadd.s32 %s180, %s181
          %s183 = smul.addr %s182, 8
          %s184 = scalar_lea.vmem %s0, %s183
          %s185 = smul.u32 18, %s21
        $region32: #{tpu_custom_call.1} parent=27 // pred_fallthru
          _
      $region28: #{tpu_custom_call.1} parent=5 // pred_fallthru
        _
      %p186 = scmp.le.s32.totalorder 1, %s13
      %p187 = scmp.lt.s32.totalorder %s13, 3
      %p188 = pnand %p186, %p187
      %p189 = pneg %p188
      // Predicated region
      $region33: #{tpu_custom_call.1} parent=5 // pred_check
        _
      $region34: #{tpu_custom_call.1} parent=5 // pred_check_branch
        %191 = sbr.rel (%p188) target = $region36
      $region35: #{tpu_custom_call.1} parent=5 // pred_region
        %s192 = ssub.s32 %s13, 1
        %s193 = smul.u32 18, %s23
        %p194 = scmp.lt.s32.totalorder %s22, 1
        %s195 = scalar_select %p194, %s22, 1
        %p196 = scmp.lt.s32.totalorder %s193, 17
        %s197 = scalar_select %p196, %s193, 17
        %s198 = smul.addr %s197, 3
        %s199 = smul.addr %s195, 54
        %s200 = sadd.s32 %s198, %s199
        %s201 = smul.addr %s200, 8
        %s202 = scalar_lea.vmem %s0, %s201
        %p203 = pneg %p53
        %p204 = pneg %p50
        %p205 = pneg %p74
        %p206 = pneg %p71
        %p207 = pneg %p95
        %p208 = pneg %p92
        %p209 = pneg %p116
        %p210 = pneg %p113
        %p211 = pneg %p144
        %p212 = pneg %p141
        %s213 = sand.u32 %s131, 1
        %s214 = scalar_lea.sflag [#allocation3], %s213
        %s215 = sand.u32 %s131, 1
        %s216 = smul.addr %s215, 256
        %s217 = scalar_lea.vmem [#allocation2], %s216
        %s218 = smul.u32 18, %s23
        %p219 = scmp.lt.s32.totalorder %s22, 1
        %s220 = scalar_select %p219, %s22, 1
        %p221 = scmp.lt.s32.totalorder %s218, 17
        %s222 = scalar_select %p221, %s218, 17
        %s223 = smul.addr %s222, 3
        %s224 = smul.addr %s220, 54
        %s225 = sadd.s32 %s223, %s224
        %s226 = smul.addr %s225, 8
        %s227 = scalar_lea.vmem %s0, %s226
        %s228 = smul.u32 18, %s23
        %s229 = smul.u32 16, %s23
        %v231 = vld [vmem:[%s3] sm:$0x7f]
        %v232 = vld [vmem:[%s227] sm:$0xff]
        %v233 = vld [vmem:[%s227 + $0x8] sm:$0xff]
        %v234 = vld [vmem:[%s227 + $0x18] sm:$0xff]
        %v235 = vld [vmem:[%s227 + $0x20] sm:$0xff]
        %v236 = vld [vmem:[%s227 + $0x30] sm:$0xff]
        %v237 = vld [vmem:[%s227 + $0x38] sm:$0xff]
        %v238 = vld [vmem:[%s227 + $0x48] sm:$0xff]
        %v239 = vld [vmem:[%s227 + $0x50] sm:$0xff]
        %v240 = vld [vmem:[%s227 + $0x60] sm:$0xff]
        %v241 = vld [vmem:[%s227 + $0x68] sm:$0xff]
        %v242 = vld [vmem:[%s227 + $0x78] sm:$0xff]
        %v243 = vld [vmem:[%s227 + $0x80] sm:$0xff]
        %v244 = vld [vmem:[%s227 + $0x90] sm:$0xff]
        %v245 = vld [vmem:[%s227 + $0x98] sm:$0xff]
        %v246 = vld [vmem:[%s227 + $0xa8] sm:$0xff]
        %v247 = vld [vmem:[%s227 + $0xb0] sm:$0xff]
        %v248 = vld [vmem:[%s227 + $0xc0] sm:$0xff]
        %v249 = vld [vmem:[%s227 + $0xc8] sm:$0xff]
        %v250 = vld [vmem:[%s227 + $0xd8] sm:$0xff]
        %v251 = vld [vmem:[%s227 + $0xe0] sm:$0xff]
        %v252 = vld [vmem:[%s227 + $0xf0] sm:$0xff]
        %v253 = vld [vmem:[%s227 + $0xf8] sm:$0xff]
        %v254 = vld [vmem:[%s227 + $0x108] sm:$0xff]
        %v255 = vld [vmem:[%s227 + $0x110] sm:$0xff]
        %v256 = vld [vmem:[%s227 + $0x120] sm:$0xff]
        %v257 = vld [vmem:[%s227 + $0x128] sm:$0xff]
        %v258 = vld [vmem:[%s227 + $0x138] sm:$0xff]
        %v259 = vld [vmem:[%s227 + $0x140] sm:$0xff]
        %v260 = vld [vmem:[%s227 + $0x150] sm:$0xff]
        %v261 = vld [vmem:[%s227 + $0x158] sm:$0xff]
        %v262 = vld [vmem:[%s227 + $0x168] sm:$0xff]
        %v263 = vld [vmem:[%s227 + $0x170] sm:$0xff]
        %v264 = vpack.c.bf16 %v233, %v232
        %v265 = vpack.c.bf16 %v235, %v234
        %v266 = vpack.c.bf16 %v237, %v236
        %v267 = vpack.c.bf16 %v239, %v238
        %v268 = vpack.c.bf16 %v241, %v240
        %v269 = vpack.c.bf16 %v243, %v242
        %v270 = vpack.c.bf16 %v245, %v244
        %v271 = vpack.c.bf16 %v247, %v246
        %v272 = vpack.c.bf16 %v249, %v248
        %v273 = vpack.c.bf16 %v251, %v250
        %v274 = vpack.c.bf16 %v253, %v252
        %v275 = vpack.c.bf16 %v255, %v254
        %v276 = vpack.c.bf16 %v257, %v256
        %v277 = vpack.c.bf16 %v259, %v258
        %v278 = vpack.c.bf16 %v261, %v260
        %v279 = vpack.c.bf16 %v263, %v262
        %v280 = vld [vmem:[%s227 + $0x1] sm:$0xff]
        %v281 = vld [vmem:[%s227 + $0x9] sm:$0xff]
        %v282 = vld [vmem:[%s227 + $0x19] sm:$0xff]
        %v283 = vld [vmem:[%s227 + $0x21] sm:$0xff]
        %v284 = vld [vmem:[%s227 + $0x31] sm:$0xff]
        %v285 = vld [vmem:[%s227 + $0x39] sm:$0xff]
        %v286 = vld [vmem:[%s227 + $0x49] sm:$0xff]
        %v287 = vld [vmem:[%s227 + $0x51] sm:$0xff]
        %v288 = vld [vmem:[%s227 + $0x61] sm:$0xff]
        %v289 = vld [vmem:[%s227 + $0x69] sm:$0xff]
        %v290 = vld [vmem:[%s227 + $0x79] sm:$0xff]
        %v291 = vld [vmem:[%s227 + $0x81] sm:$0xff]
        %v292 = vld [vmem:[%s227 + $0x91] sm:$0xff]
        %v293 = vld [vmem:[%s227 + $0x99] sm:$0xff]
        %v294 = vld [vmem:[%s227 + $0xa9] sm:$0xff]
        %v295 = vld [vmem:[%s227 + $0xb1] sm:$0xff]
        %v296 = vld [vmem:[%s227 + $0xc1] sm:$0xff]
        %v297 = vld [vmem:[%s227 + $0xc9] sm:$0xff]
        %v298 = vld [vmem:[%s227 + $0xd9] sm:$0xff]
        %v299 = vld [vmem:[%s227 + $0xe1] sm:$0xff]
        %v300 = vld [vmem:[%s227 + $0xf1] sm:$0xff]
        %v301 = vld [vmem:[%s227 + $0xf9] sm:$0xff]
        %v302 = vld [vmem:[%s227 + $0x109] sm:$0xff]
        %v303 = vld [vmem:[%s227 + $0x111] sm:$0xff]
        %v304 = vld [vmem:[%s227 + $0x121] sm:$0xff]
        %v305 = vld [vmem:[%s227 + $0x129] sm:$0xff]
        %v306 = vld [vmem:[%s227 + $0x139] sm:$0xff]
        %v307 = vld [vmem:[%s227 + $0x141] sm:$0xff]
        %v308 = vld [vmem:[%s227 + $0x151] sm:$0xff]
        %v309 = vld [vmem:[%s227 + $0x159] sm:$0xff]
        %v310 = vld [vmem:[%s227 + $0x169] sm:$0xff]
        %v311 = vld [vmem:[%s227 + $0x171] sm:$0xff]
        %v312 = vpack.c.bf16 %v281, %v280
        %v313 = vpack.c.bf16 %v283, %v282
        %v314 = vpack.c.bf16 %v285, %v284
        %v315 = vpack.c.bf16 %v287, %v286
        %v316 = vpack.c.bf16 %v289, %v288
        %v317 = vpack.c.bf16 %v291, %v290
        %v318 = vpack.c.bf16 %v293, %v292
        %v319 = vpack.c.bf16 %v295, %v294
        %v320 = vpack.c.bf16 %v297, %v296
        %v321 = vpack.c.bf16 %v299, %v298
        %v322 = vpack.c.bf16 %v301, %v300
        %v323 = vpack.c.bf16 %v303, %v302
        %v324 = vpack.c.bf16 %v305, %v304
        %v325 = vpack.c.bf16 %v307, %v306
        %v326 = vpack.c.bf16 %v309, %v308
        %v327 = vpack.c.bf16 %v311, %v310
        %v328 = vld [vmem:[%s227 + $0x2] sm:$0xff]
        %v329 = vld [vmem:[%s227 + $0xa] sm:$0xff]
        %v330 = vld [vmem:[%s227 + $0x1a] sm:$0xff]
        %v331 = vld [vmem:[%s227 + $0x22] sm:$0xff]
        %v332 = vld [vmem:[%s227 + $0x32] sm:$0xff]
        %v333 = vld [vmem:[%s227 + $0x3a] sm:$0xff]
        %v334 = vld [vmem:[%s227 + $0x4a] sm:$0xff]
        %v335 = vld [vmem:[%s227 + $0x52] sm:$0xff]
        %v336 = vld [vmem:[%s227 + $0x62] sm:$0xff]
        %v337 = vld [vmem:[%s227 + $0x6a] sm:$0xff]
        %v338 = vld [vmem:[%s227 + $0x7a] sm:$0xff]
        %v339 = vld [vmem:[%s227 + $0x82] sm:$0xff]
        %v340 = vld [vmem:[%s227 + $0x92] sm:$0xff]
        %v341 = vld [vmem:[%s227 + $0x9a] sm:$0xff]
        %v342 = vld [vmem:[%s227 + $0xaa] sm:$0xff]
        %v343 = vld [vmem:[%s227 + $0xb2] sm:$0xff]
        %v344 = vld [vmem:[%s227 + $0xc2] sm:$0xff]
        %v345 = vld [vmem:[%s227 + $0xca] sm:$0xff]
        %v346 = vld [vmem:[%s227 + $0xda] sm:$0xff]
        %v347 = vld [vmem:[%s227 + $0xe2] sm:$0xff]
        %v348 = vld [vmem:[%s227 + $0xf2] sm:$0xff]
        %v349 = vld [vmem:[%s227 + $0xfa] sm:$0xff]
        %v350 = vld [vmem:[%s227 + $0x10a] sm:$0xff]
        %v351 = vld [vmem:[%s227 + $0x112] sm:$0xff]
        %v352 = vld [vmem:[%s227 + $0x122] sm:$0xff]
        %v353 = vld [vmem:[%s227 + $0x12a] sm:$0xff]
        %v354 = vld [vmem:[%s227 + $0x13a] sm:$0xff]
        %v355 = vld [vmem:[%s227 + $0x142] sm:$0xff]
        %v356 = vld [vmem:[%s227 + $0x152] sm:$0xff]
        %v357 = vld [vmem:[%s227 + $0x15a] sm:$0xff]
        %v358 = vld [vmem:[%s227 + $0x16a] sm:$0xff]
        %v359 = vld [vmem:[%s227 + $0x172] sm:$0xff]
        %v360 = vpack.c.bf16 %v329, %v328
        %v361 = vpack.c.bf16 %v331, %v330
        %v362 = vpack.c.bf16 %v333, %v332
        %v363 = vpack.c.bf16 %v335, %v334
        %v364 = vpack.c.bf16 %v337, %v336
        %v365 = vpack.c.bf16 %v339, %v338
        %v366 = vpack.c.bf16 %v341, %v340
        %v367 = vpack.c.bf16 %v343, %v342
        %v368 = vpack.c.bf16 %v345, %v344
        %v369 = vpack.c.bf16 %v347, %v346
        %v370 = vpack.c.bf16 %v349, %v348
        %v371 = vpack.c.bf16 %v351, %v350
        %v372 = vpack.c.bf16 %v353, %v352
        %v373 = vpack.c.bf16 %v355, %v354
        %v374 = vpack.c.bf16 %v357, %v356
        %v375 = vpack.c.bf16 %v359, %v358
        %s376 = scalar_lea.vmem %s227, 24
        %v377 = vld [vmem:[%s376] sm:$0xff]
        %v378 = vld [vmem:[%s376 + $0x8] sm:$0xff]
        %v379 = vld [vmem:[%s376 + $0x18] sm:$0xff]
        %v380 = vld [vmem:[%s376 + $0x20] sm:$0xff]
        %v381 = vld [vmem:[%s376 + $0x30] sm:$0xff]
        %v382 = vld [vmem:[%s376 + $0x38] sm:$0xff]
        %v383 = vld [vmem:[%s376 + $0x48] sm:$0xff]
        %v384 = vld [vmem:[%s376 + $0x50] sm:$0xff]
        %v385 = vld [vmem:[%s376 + $0x60] sm:$0xff]
        %v386 = vld [vmem:[%s376 + $0x68] sm:$0xff]
        %v387 = vld [vmem:[%s376 + $0x78] sm:$0xff]
        %v388 = vld [vmem:[%s376 + $0x80] sm:$0xff]
        %v389 = vld [vmem:[%s376 + $0x90] sm:$0xff]
        %v390 = vld [vmem:[%s376 + $0x98] sm:$0xff]
        %v391 = vld [vmem:[%s376 + $0xa8] sm:$0xff]
        %v392 = vld [vmem:[%s376 + $0xb0] sm:$0xff]
        %v393 = vld [vmem:[%s376 + $0xc0] sm:$0xff]
        %v394 = vld [vmem:[%s376 + $0xc8] sm:$0xff]
        %v395 = vld [vmem:[%s376 + $0xd8] sm:$0xff]
        %v396 = vld [vmem:[%s376 + $0xe0] sm:$0xff]
        %v397 = vld [vmem:[%s376 + $0xf0] sm:$0xff]
        %v398 = vld [vmem:[%s376 + $0xf8] sm:$0xff]
        %v399 = vld [vmem:[%s376 + $0x108] sm:$0xff]
        %v400 = vld [vmem:[%s376 + $0x110] sm:$0xff]
        %v401 = vld [vmem:[%s376 + $0x120] sm:$0xff]
        %v402 = vld [vmem:[%s376 + $0x128] sm:$0xff]
        %v403 = vld [vmem:[%s376 + $0x138] sm:$0xff]
        %v404 = vld [vmem:[%s376 + $0x140] sm:$0xff]
        %v405 = vld [vmem:[%s376 + $0x150] sm:$0xff]
        %v406 = vld [vmem:[%s376 + $0x158] sm:$0xff]
        %v407 = vld [vmem:[%s376 + $0x168] sm:$0xff]
        %v408 = vld [vmem:[%s376 + $0x170] sm:$0xff]
        %v409 = vpack.c.bf16 %v378, %v377
        %v410 = vpack.c.bf16 %v380, %v379
        %v411 = vpack.c.bf16 %v382, %v381
        %v412 = vpack.c.bf16 %v384, %v383
        %v413 = vpack.c.bf16 %v386, %v385
        %v414 = vpack.c.bf16 %v388, %v387
        %v415 = vpack.c.bf16 %v390, %v389
        %v416 = vpack.c.bf16 %v392, %v391
        %v417 = vpack.c.bf16 %v394, %v393
        %v418 = vpack.c.bf16 %v396, %v395
        %v419 = vpack.c.bf16 %v398, %v397
        %v420 = vpack.c.bf16 %v400, %v399
        %v421 = vpack.c.bf16 %v402, %v401
        %v422 = vpack.c.bf16 %v404, %v403
        %v423 = vpack.c.bf16 %v406, %v405
        %v424 = vpack.c.bf16 %v408, %v407
        %v425 = vld [vmem:[%s376 + $0x1] sm:$0xff]
        %v426 = vld [vmem:[%s376 + $0x9] sm:$0xff]
        %v427 = vld [vmem:[%s376 + $0x19] sm:$0xff]
        %v428 = vld [vmem:[%s376 + $0x21] sm:$0xff]
        %v429 = vld [vmem:[%s376 + $0x31] sm:$0xff]
        %v430 = vld [vmem:[%s376 + $0x39] sm:$0xff]
        %v431 = vld [vmem:[%s376 + $0x49] sm:$0xff]
        %v432 = vld [vmem:[%s376 + $0x51] sm:$0xff]
        %v433 = vld [vmem:[%s376 + $0x61] sm:$0xff]
        %v434 = vld [vmem:[%s376 + $0x69] sm:$0xff]
        %v435 = vld [vmem:[%s376 + $0x79] sm:$0xff]
        %v436 = vld [vmem:[%s376 + $0x81] sm:$0xff]
        %v437 = vld [vmem:[%s376 + $0x91] sm:$0xff]
        %v438 = vld [vmem:[%s376 + $0x99] sm:$0xff]
        %v439 = vld [vmem:[%s376 + $0xa9] sm:$0xff]
        %v440 = vld [vmem:[%s376 + $0xb1] sm:$0xff]
        %v441 = vld [vmem:[%s376 + $0xc1] sm:$0xff]
        %v442 = vld [vmem:[%s376 + $0xc9] sm:$0xff]
        %v443 = vld [vmem:[%s376 + $0xd9] sm:$0xff]
        %v444 = vld [vmem:[%s376 + $0xe1] sm:$0xff]
        %v445 = vld [vmem:[%s376 + $0xf1] sm:$0xff]
        %v446 = vld [vmem:[%s376 + $0xf9] sm:$0xff]
        %v447 = vld [vmem:[%s376 + $0x109] sm:$0xff]
        %v448 = vld [vmem:[%s376 + $0x111] sm:$0xff]
        %v449 = vld [vmem:[%s376 + $0x121] sm:$0xff]
        %v450 = vld [vmem:[%s376 + $0x129] sm:$0xff]
        %v451 = vld [vmem:[%s376 + $0x139] sm:$0xff]
        %v452 = vld [vmem:[%s376 + $0x141] sm:$0xff]
        %v453 = vld [vmem:[%s376 + $0x151] sm:$0xff]
        %v454 = vld [vmem:[%s376 + $0x159] sm:$0xff]
        %v455 = vld [vmem:[%s376 + $0x169] sm:$0xff]
        %v456 = vld [vmem:[%s376 + $0x171] sm:$0xff]
        %v457 = vpack.c.bf16 %v426, %v425
        %v458 = vpack.c.bf16 %v428, %v427
        %v459 = vpack.c.bf16 %v430, %v429
        %v460 = vpack.c.bf16 %v432, %v431
        %v461 = vpack.c.bf16 %v434, %v433
        %v462 = vpack.c.bf16 %v436, %v435
        %v463 = vpack.c.bf16 %v438, %v437
        %v464 = vpack.c.bf16 %v440, %v439
        %v465 = vpack.c.bf16 %v442, %v441
        %v466 = vpack.c.bf16 %v444, %v443
        %v467 = vpack.c.bf16 %v446, %v445
        %v468 = vpack.c.bf16 %v448, %v447
        %v469 = vpack.c.bf16 %v450, %v449
        %v470 = vpack.c.bf16 %v452, %v451
        %v471 = vpack.c.bf16 %v454, %v453
        %v472 = vpack.c.bf16 %v456, %v455
        %v473 = vld [vmem:[%s376 + $0x2] sm:$0xff]
        %v474 = vld [vmem:[%s376 + $0xa] sm:$0xff]
        %v475 = vld [vmem:[%s376 + $0x1a] sm:$0xff]
        %v476 = vld [vmem:[%s376 + $0x22] sm:$0xff]
        %v477 = vld [vmem:[%s376 + $0x32] sm:$0xff]
        %v478 = vld [vmem:[%s376 + $0x3a] sm:$0xff]
        %v479 = vld [vmem:[%s376 + $0x4a] sm:$0xff]
        %v480 = vld [vmem:[%s376 + $0x52] sm:$0xff]
        %v481 = vld [vmem:[%s376 + $0x62] sm:$0xff]
        %v482 = vld [vmem:[%s376 + $0x6a] sm:$0xff]
        %v483 = vld [vmem:[%s376 + $0x7a] sm:$0xff]
        %v484 = vld [vmem:[%s376 + $0x82] sm:$0xff]
        %v485 = vld [vmem:[%s376 + $0x92] sm:$0xff]
        %v486 = vld [vmem:[%s376 + $0x9a] sm:$0xff]
        %v487 = vld [vmem:[%s376 + $0xaa] sm:$0xff]
        %v488 = vld [vmem:[%s376 + $0xb2] sm:$0xff]
        %v489 = vld [vmem:[%s376 + $0xc2] sm:$0xff]
        %v490 = vld [vmem:[%s376 + $0xca] sm:$0xff]
        %v491 = vld [vmem:[%s376 + $0xda] sm:$0xff]
        %v492 = vld [vmem:[%s376 + $0xe2] sm:$0xff]
        %v493 = vld [vmem:[%s376 + $0xf2] sm:$0xff]
        %v494 = vld [vmem:[%s376 + $0xfa] sm:$0xff]
        %v495 = vld [vmem:[%s376 + $0x10a] sm:$0xff]
        %v496 = vld [vmem:[%s376 + $0x112] sm:$0xff]
        %v497 = vld [vmem:[%s376 + $0x122] sm:$0xff]
        %v498 = vld [vmem:[%s376 + $0x12a] sm:$0xff]
        %v499 = vld [vmem:[%s376 + $0x13a] sm:$0xff]
        %v500 = vld [vmem:[%s376 + $0x142] sm:$0xff]
        %v501 = vld [vmem:[%s376 + $0x152] sm:$0xff]
        %v502 = vld [vmem:[%s376 + $0x15a] sm:$0xff]
        %v503 = vld [vmem:[%s376 + $0x16a] sm:$0xff]
        %v504 = vld [vmem:[%s376 + $0x172] sm:$0xff]
        %v505 = vpack.c.bf16 %v474, %v473
        %v506 = vpack.c.bf16 %v476, %v475
        %v507 = vpack.c.bf16 %v478, %v477
        %v508 = vpack.c.bf16 %v480, %v479
        %v509 = vpack.c.bf16 %v482, %v481
        %v510 = vpack.c.bf16 %v484, %v483
        %v511 = vpack.c.bf16 %v486, %v485
        %v512 = vpack.c.bf16 %v488, %v487
        %v513 = vpack.c.bf16 %v490, %v489
        %v514 = vpack.c.bf16 %v492, %v491
        %v515 = vpack.c.bf16 %v494, %v493
        %v516 = vpack.c.bf16 %v496, %v495
        %v517 = vpack.c.bf16 %v498, %v497
        %v518 = vpack.c.bf16 %v500, %v499
        %v519 = vpack.c.bf16 %v502, %v501
        %v520 = vpack.c.bf16 %v504, %v503
        %s521 = scalar_lea.vmem %s227, 48
        %v522 = vld [vmem:[%s521] sm:$0xff]
        %v523 = vld [vmem:[%s521 + $0x8] sm:$0xff]
        %v524 = vld [vmem:[%s521 + $0x18] sm:$0xff]
        %v525 = vld [vmem:[%s521 + $0x20] sm:$0xff]
        %v526 = vld [vmem:[%s521 + $0x30] sm:$0xff]
        %v527 = vld [vmem:[%s521 + $0x38] sm:$0xff]
        %v528 = vld [vmem:[%s521 + $0x48] sm:$0xff]
        %v529 = vld [vmem:[%s521 + $0x50] sm:$0xff]
        %v530 = vld [vmem:[%s521 + $0x60] sm:$0xff]
        %v531 = vld [vmem:[%s521 + $0x68] sm:$0xff]
        %v532 = vld [vmem:[%s521 + $0x78] sm:$0xff]
        %v533 = vld [vmem:[%s521 + $0x80] sm:$0xff]
        %v534 = vld [vmem:[%s521 + $0x90] sm:$0xff]
        %v535 = vld [vmem:[%s521 + $0x98] sm:$0xff]
        %v536 = vld [vmem:[%s521 + $0xa8] sm:$0xff]
        %v537 = vld [vmem:[%s521 + $0xb0] sm:$0xff]
        %v538 = vld [vmem:[%s521 + $0xc0] sm:$0xff]
        %v539 = vld [vmem:[%s521 + $0xc8] sm:$0xff]
        %v540 = vld [vmem:[%s521 + $0xd8] sm:$0xff]
        %v541 = vld [vmem:[%s521 + $0xe0] sm:$0xff]
        %v542 = vld [vmem:[%s521 + $0xf0] sm:$0xff]
        %v543 = vld [vmem:[%s521 + $0xf8] sm:$0xff]
        %v544 = vld [vmem:[%s521 + $0x108] sm:$0xff]
        %v545 = vld [vmem:[%s521 + $0x110] sm:$0xff]
        %v546 = vld [vmem:[%s521 + $0x120] sm:$0xff]
        %v547 = vld [vmem:[%s521 + $0x128] sm:$0xff]
        %v548 = vld [vmem:[%s521 + $0x138] sm:$0xff]
        %v549 = vld [vmem:[%s521 + $0x140] sm:$0xff]
        %v550 = vld [vmem:[%s521 + $0x150] sm:$0xff]
        %v551 = vld [vmem:[%s521 + $0x158] sm:$0xff]
        %v552 = vld [vmem:[%s521 + $0x168] sm:$0xff]
        %v553 = vld [vmem:[%s521 + $0x170] sm:$0xff]
        %v554 = vpack.c.bf16 %v523, %v522
        %v555 = vpack.c.bf16 %v525, %v524
        %v556 = vpack.c.bf16 %v527, %v526
        %v557 = vpack.c.bf16 %v529, %v528
        %v558 = vpack.c.bf16 %v531, %v530
        %v559 = vpack.c.bf16 %v533, %v532
        %v560 = vpack.c.bf16 %v535, %v534
        %v561 = vpack.c.bf16 %v537, %v536
        %v562 = vpack.c.bf16 %v539, %v538
        %v563 = vpack.c.bf16 %v541, %v540
        %v564 = vpack.c.bf16 %v543, %v542
        %v565 = vpack.c.bf16 %v545, %v544
        %v566 = vpack.c.bf16 %v547, %v546
        %v567 = vpack.c.bf16 %v549, %v548
        %v568 = vpack.c.bf16 %v551, %v550
        %v569 = vpack.c.bf16 %v553, %v552
        %v570 = vld [vmem:[%s521 + $0x1] sm:$0xff]
        %v571 = vld [vmem:[%s521 + $0x9] sm:$0xff]
        %v572 = vld [vmem:[%s521 + $0x19] sm:$0xff]
        %v573 = vld [vmem:[%s521 + $0x21] sm:$0xff]
        %v574 = vld [vmem:[%s521 + $0x31] sm:$0xff]
        %v575 = vld [vmem:[%s521 + $0x39] sm:$0xff]
        %v576 = vld [vmem:[%s521 + $0x49] sm:$0xff]
        %v577 = vld [vmem:[%s521 + $0x51] sm:$0xff]
        %v578 = vld [vmem:[%s521 + $0x61] sm:$0xff]
        %v579 = vld [vmem:[%s521 + $0x69] sm:$0xff]
        %v580 = vld [vmem:[%s521 + $0x79] sm:$0xff]
        %v581 = vld [vmem:[%s521 + $0x81] sm:$0xff]
        %v582 = vld [vmem:[%s521 + $0x91] sm:$0xff]
        %v583 = vld [vmem:[%s521 + $0x99] sm:$0xff]
        %v584 = vld [vmem:[%s521 + $0xa9] sm:$0xff]
        %v585 = vld [vmem:[%s521 + $0xb1] sm:$0xff]
        %v586 = vld [vmem:[%s521 + $0xc1] sm:$0xff]
        %v587 = vld [vmem:[%s521 + $0xc9] sm:$0xff]
        %v588 = vld [vmem:[%s521 + $0xd9] sm:$0xff]
        %v589 = vld [vmem:[%s521 + $0xe1] sm:$0xff]
        %v590 = vld [vmem:[%s521 + $0xf1] sm:$0xff]
        %v591 = vld [vmem:[%s521 + $0xf9] sm:$0xff]
        %v592 = vld [vmem:[%s521 + $0x109] sm:$0xff]
        %v593 = vld [vmem:[%s521 + $0x111] sm:$0xff]
        %v594 = vld [vmem:[%s521 + $0x121] sm:$0xff]
        %v595 = vld [vmem:[%s521 + $0x129] sm:$0xff]
        %v596 = vld [vmem:[%s521 + $0x139] sm:$0xff]
        %v597 = vld [vmem:[%s521 + $0x141] sm:$0xff]
        %v598 = vld [vmem:[%s521 + $0x151] sm:$0xff]
        %v599 = vld [vmem:[%s521 + $0x159] sm:$0xff]
        %v600 = vld [vmem:[%s521 + $0x169] sm:$0xff]
        %v601 = vld [vmem:[%s521 + $0x171] sm:$0xff]
        %v602 = vpack.c.bf16 %v571, %v570
        %v603 = vpack.c.bf16 %v573, %v572
        %v604 = vpack.c.bf16 %v575, %v574
        %v605 = vpack.c.bf16 %v577, %v576
        %v606 = vpack.c.bf16 %v579, %v578
        %v607 = vpack.c.bf16 %v581, %v580
        %v608 = vpack.c.bf16 %v583, %v582
        %v609 = vpack.c.bf16 %v585, %v584
        %v610 = vpack.c.bf16 %v587, %v586
        %v611 = vpack.c.bf16 %v589, %v588
        %v612 = vpack.c.bf16 %v591, %v590
        %v613 = vpack.c.bf16 %v593, %v592
        %v614 = vpack.c.bf16 %v595, %v594
        %v615 = vpack.c.bf16 %v597, %v596
        %v616 = vpack.c.bf16 %v599, %v598
        %v617 = vpack.c.bf16 %v601, %v600
        %v618 = vld [vmem:[%s521 + $0x2] sm:$0xff]
        %v619 = vld [vmem:[%s521 + $0xa] sm:$0xff]
        %v620 = vld [vmem:[%s521 + $0x1a] sm:$0xff]
        %v621 = vld [vmem:[%s521 + $0x22] sm:$0xff]
        %v622 = vld [vmem:[%s521 + $0x32] sm:$0xff]
        %v623 = vld [vmem:[%s521 + $0x3a] sm:$0xff]
        %v624 = vld [vmem:[%s521 + $0x4a] sm:$0xff]
        %v625 = vld [vmem:[%s521 + $0x52] sm:$0xff]
        %v626 = vld [vmem:[%s521 + $0x62] sm:$0xff]
        %v627 = vld [vmem:[%s521 + $0x6a] sm:$0xff]
        %v628 = vld [vmem:[%s521 + $0x7a] sm:$0xff]
        %v629 = vld [vmem:[%s521 + $0x82] sm:$0xff]
        %v630 = vld [vmem:[%s521 + $0x92] sm:$0xff]
        %v631 = vld [vmem:[%s521 + $0x9a] sm:$0xff]
        %v632 = vld [vmem:[%s521 + $0xaa] sm:$0xff]
        %v633 = vld [vmem:[%s521 + $0xb2] sm:$0xff]
        %v634 = vld [vmem:[%s521 + $0xc2] sm:$0xff]
        %v635 = vld [vmem:[%s521 + $0xca] sm:$0xff]
        %v636 = vld [vmem:[%s521 + $0xda] sm:$0xff]
        %v637 = vld [vmem:[%s521 + $0xe2] sm:$0xff]
        %v638 = vld [vmem:[%s521 + $0xf2] sm:$0xff]
        %v639 = vld [vmem:[%s521 + $0xfa] sm:$0xff]
        %v640 = vld [vmem:[%s521 + $0x10a] sm:$0xff]
        %v641 = vld [vmem:[%s521 + $0x112] sm:$0xff]
        %v642 = vld [vmem:[%s521 + $0x122] sm:$0xff]
        %v643 = vld [vmem:[%s521 + $0x12a] sm:$0xff]
        %v644 = vld [vmem:[%s521 + $0x13a] sm:$0xff]
        %v645 = vld [vmem:[%s521 + $0x142] sm:$0xff]
        %v646 = vld [vmem:[%s521 + $0x152] sm:$0xff]
        %v647 = vld [vmem:[%s521 + $0x15a] sm:$0xff]
        %v648 = vld [vmem:[%s521 + $0x16a] sm:$0xff]
        %v649 = vld [vmem:[%s521 + $0x172] sm:$0xff]
        %v650 = vpack.c.bf16 %v619, %v618
        %v651 = vpack.c.bf16 %v621, %v620
        %v652 = vpack.c.bf16 %v623, %v622
        %v653 = vpack.c.bf16 %v625, %v624
        %v654 = vpack.c.bf16 %v627, %v626
        %v655 = vpack.c.bf16 %v629, %v628
        %v656 = vpack.c.bf16 %v631, %v630
        %v657 = vpack.c.bf16 %v633, %v632
        %v658 = vpack.c.bf16 %v635, %v634
        %v659 = vpack.c.bf16 %v637, %v636
        %v660 = vpack.c.bf16 %v639, %v638
        %v661 = vpack.c.bf16 %v641, %v640
        %v662 = vpack.c.bf16 %v643, %v642
        %v663 = vpack.c.bf16 %v645, %v644
        %v664 = vpack.c.bf16 %v647, %v646
        %v665 = vpack.c.bf16 %v649, %v648
        %v666 = vld [vmem:[%s1] sm:$0xf]
        %v667 = vld [vmem:[%s1 + $0x4] sm:$0xf]
        %v668 = vld [vmem:[%s1 + $0x8] sm:$0xf]
        %v669 = vld [vmem:[%s1 + $0xc] sm:$0xf]
        %v670 = vld [vmem:[%s1 + $0x10] sm:$0xf]
        %v671 = vld [vmem:[%s1 + $0x14] sm:$0xf]
        %v672 = vld [vmem:[%s1 + $0x18] sm:$0xf]
        %v673 = vld [vmem:[%s1 + $0x1c] sm:$0xf]
        %v674 = vld [vmem:[%s1 + $0x20] sm:$0xf]
        %v675 = vld [vmem:[%s1 + $0x24] sm:$0xf]
        %v676 = vld [vmem:[%s1 + $0x28] sm:$0xf]
        %v677 = vld [vmem:[%s1 + $0x2c] sm:$0xf]
        %v678 = vld [vmem:[%s1 + $0x30] sm:$0xf]
        %v679 = vld [vmem:[%s1 + $0x34] sm:$0xf]
        %v680 = vld [vmem:[%s1 + $0x38] sm:$0xf]
        %v681 = vld [vmem:[%s1 + $0x3c] sm:$0xf]
        %v682 = vld [vmem:[%s1 + $0x40] sm:$0xf]
        %v683 = vld [vmem:[%s1 + $0x44] sm:$0xf]
        %v684 = vld [vmem:[%s1 + $0x48] sm:$0xf]
        %v685 = vld [vmem:[%s1 + $0x4c] sm:$0xf]
        %v686 = vld [vmem:[%s1 + $0x50] sm:$0xf]
        %v687 = vld [vmem:[%s1 + $0x54] sm:$0xf]
        %v688 = vld [vmem:[%s1 + $0x58] sm:$0xf]
        %v689 = vld [vmem:[%s1 + $0x5c] sm:$0xf]
        %v690 = vld [vmem:[%s1 + $0x60] sm:$0xf]
        %v691 = vld [vmem:[%s1 + $0x64] sm:$0xf]
        %v692 = vld [vmem:[%s1 + $0x68] sm:$0xf]
        %v693 = vld [vmem:[%s1 + $0x6c] sm:$0xf]
        %v694 = vld [vmem:[%s1 + $0x70] sm:$0xf]
        %v695 = vld [vmem:[%s1 + $0x74] sm:$0xf]
        %v696 = vld [vmem:[%s1 + $0x78] sm:$0xf]
        %v697 = vld [vmem:[%s1 + $0x7c] sm:$0xf]
        %v698 = vld [vmem:[%s1 + $0x80] sm:$0xf]
        %v699 = vld [vmem:[%s1 + $0x84] sm:$0xf]
        %v700 = vld [vmem:[%s1 + $0x88] sm:$0xf]
        %v701 = vld [vmem:[%s1 + $0x8c] sm:$0xf]
        %v702 = vld [vmem:[%s1 + $0x90] sm:$0xf]
        %v703 = vld [vmem:[%s1 + $0x94] sm:$0xf]
        %v704 = vld [vmem:[%s1 + $0x98] sm:$0xf]
        %v705 = vld [vmem:[%s1 + $0x9c] sm:$0xf]
        %v706 = vld [vmem:[%s1 + $0xa0] sm:$0xf]
        %v707 = vld [vmem:[%s1 + $0xa4] sm:$0xf]
        %v708 = vld [vmem:[%s1 + $0xa8] sm:$0xf]
        %v709 = vld [vmem:[%s1 + $0xac] sm:$0xf]
        %v710 = vld [vmem:[%s1 + $0xb0] sm:$0xf]
        %v711 = vld [vmem:[%s1 + $0xb4] sm:$0xf]
        %v712 = vld [vmem:[%s1 + $0xb8] sm:$0xf]
        %v713 = vld [vmem:[%s1 + $0xbc] sm:$0xf]
        %v714 = vld [vmem:[%s1 + $0xc0] sm:$0xf]
        %v715 = vld [vmem:[%s1 + $0xc4] sm:$0xf]
        %v716 = vld [vmem:[%s1 + $0xc8] sm:$0xf]
        %v717 = vld [vmem:[%s1 + $0xcc] sm:$0xf]
        %v718 = vld [vmem:[%s1 + $0xd0] sm:$0xf]
        %v719 = vld [vmem:[%s1 + $0xd4] sm:$0xf]
        %v720 = vld [vmem:[%s1 + $0xd8] sm:$0xf]
        %v721 = vld [vmem:[%s1 + $0xdc] sm:$0xf]
        %v722 = vld [vmem:[%s1 + $0xe0] sm:$0xf]
        %v723 = vld [vmem:[%s1 + $0xe4] sm:$0xf]
        %v724 = vld [vmem:[%s1 + $0xe8] sm:$0xf]
        %v725 = vld [vmem:[%s1 + $0xec] sm:$0xf]
        %v726 = vld [vmem:[%s1 + $0xf0] sm:$0xf]
        %v727 = vld [vmem:[%s1 + $0xf4] sm:$0xf]
        %v728 = vld [vmem:[%s1 + $0xf8] sm:$0xf]
        %v729 = vld [vmem:[%s1 + $0xfc] sm:$0xf]
        %v730 = vld [vmem:[%s1 + $0x100] sm:$0xf]
        %v731 = vld [vmem:[%s1 + $0x104] sm:$0xf]
        %v732 = vld [vmem:[%s1 + $0x108] sm:$0xf]
        %v733 = vld [vmem:[%s1 + $0x10c] sm:$0xf]
        %v734 = vld [vmem:[%s1 + $0x110] sm:$0xf]
        %v735 = vld [vmem:[%s1 + $0x114] sm:$0xf]
        %v736 = vld [vmem:[%s1 + $0x118] sm:$0xf]
        %v737 = vld [vmem:[%s1 + $0x11c] sm:$0xf]
        %v738 = vld [vmem:[%s1 + $0x120] sm:$0xf]
        %v739 = vld [vmem:[%s1 + $0x124] sm:$0xf]
        %v740 = vld [vmem:[%s1 + $0x128] sm:$0xf]
        %v741 = vld [vmem:[%s1 + $0x12c] sm:$0xf]
        %v742 = vld [vmem:[%s1 + $0x130] sm:$0xf]
        %v743 = vld [vmem:[%s1 + $0x134] sm:$0xf]
        %v744 = vld [vmem:[%s1 + $0x138] sm:$0xf]
        %v745 = vld [vmem:[%s1 + $0x13c] sm:$0xf]
        %v746 = vld [vmem:[%s1 + $0x140] sm:$0xf]
        %v747 = vld [vmem:[%s1 + $0x144] sm:$0xf]
        %v748 = vld [vmem:[%s1 + $0x148] sm:$0xf]
        %v749 = vld [vmem:[%s1 + $0x14c] sm:$0xf]
        %v750 = vld [vmem:[%s1 + $0x150] sm:$0xf]
        %v751 = vld [vmem:[%s1 + $0x154] sm:$0xf]
        %v752 = vld [vmem:[%s1 + $0x158] sm:$0xf]
        %v753 = vld [vmem:[%s1 + $0x15c] sm:$0xf]
        %v754 = vld [vmem:[%s1 + $0x160] sm:$0xf]
        %v755 = vld [vmem:[%s1 + $0x164] sm:$0xf]
        %v756 = vld [vmem:[%s1 + $0x168] sm:$0xf]
        %v757 = vld [vmem:[%s1 + $0x16c] sm:$0xf]
        %v758 = vld [vmem:[%s1 + $0x170] sm:$0xf]
        %v759 = vld [vmem:[%s1 + $0x174] sm:$0xf]
        %v760 = vld [vmem:[%s1 + $0x178] sm:$0xf]
        %v761 = vld [vmem:[%s1 + $0x17c] sm:$0xf]
        %v762 = vld [vmem:[%s1 + $0x180] sm:$0xf]
        %v763 = vld [vmem:[%s1 + $0x184] sm:$0xf]
        %v764 = vld [vmem:[%s1 + $0x188] sm:$0xf]
        %v765 = vld [vmem:[%s1 + $0x18c] sm:$0xf]
        %v766 = vld [vmem:[%s1 + $0x190] sm:$0xf]
        %v767 = vld [vmem:[%s1 + $0x194] sm:$0xf]
        %v768 = vld [vmem:[%s1 + $0x198] sm:$0xf]
        %v769 = vld [vmem:[%s1 + $0x19c] sm:$0xf]
        %v770 = vld [vmem:[%s1 + $0x1a0] sm:$0xf]
        %v771 = vld [vmem:[%s1 + $0x1a4] sm:$0xf]
        %v772 = vld [vmem:[%s1 + $0x1a8] sm:$0xf]
        %v773 = vld [vmem:[%s1 + $0x1ac] sm:$0xf]
        %v774 = vld [vmem:[%s1 + $0x1b0] sm:$0xf]
        %v775 = vld [vmem:[%s1 + $0x1b4] sm:$0xf]
        %v776 = vld [vmem:[%s1 + $0x1b8] sm:$0xf]
        %v777 = vld [vmem:[%s1 + $0x1bc] sm:$0xf]
        %v778 = vld [vmem:[%s1 + $0x1c0] sm:$0xf]
        %v779 = vld [vmem:[%s1 + $0x1c4] sm:$0xf]
        %v780 = vld [vmem:[%s1 + $0x1c8] sm:$0xf]
        %v781 = vld [vmem:[%s1 + $0x1cc] sm:$0xf]
        %v782 = vld [vmem:[%s1 + $0x1d0] sm:$0xf]
        %v783 = vld [vmem:[%s1 + $0x1d4] sm:$0xf]
        %v784 = vld [vmem:[%s1 + $0x1d8] sm:$0xf]
        %v785 = vld [vmem:[%s1 + $0x1dc] sm:$0xf]
        %v786 = vld [vmem:[%s1 + $0x1e0] sm:$0xf]
        %v787 = vld [vmem:[%s1 + $0x1e4] sm:$0xf]
        %v788 = vld [vmem:[%s1 + $0x1e8] sm:$0xf]
        %v789 = vld [vmem:[%s1 + $0x1ec] sm:$0xf]
        %v790 = vld [vmem:[%s1 + $0x1f0] sm:$0xf]
        %v791 = vld [vmem:[%s1 + $0x1f4] sm:$0xf]
        %v792 = vld [vmem:[%s1 + $0x1f8] sm:$0xf]
        %v793 = vld [vmem:[%s1 + $0x1fc] sm:$0xf]
        %v794 = vld [vmem:[%s1 + $0x200] sm:$0xf]
        %v795 = vld [vmem:[%s1 + $0x204] sm:$0xf]
        %v796 = vld [vmem:[%s1 + $0x208] sm:$0xf]
        %v797 = vld [vmem:[%s1 + $0x20c] sm:$0xf]
        %v798 = vld [vmem:[%s1 + $0x210] sm:$0xf]
        %v799 = vld [vmem:[%s1 + $0x214] sm:$0xf]
        %v800 = vld [vmem:[%s1 + $0x218] sm:$0xf]
        %v801 = vld [vmem:[%s1 + $0x21c] sm:$0xf]
        %v802 = vld [vmem:[%s1 + $0x220] sm:$0xf]
        %v803 = vld [vmem:[%s1 + $0x224] sm:$0xf]
        %v804 = vld [vmem:[%s1 + $0x228] sm:$0xf]
        %v805 = vld [vmem:[%s1 + $0x22c] sm:$0xf]
        %v806 = vld [vmem:[%s1 + $0x230] sm:$0xf]
        %v807 = vld [vmem:[%s1 + $0x234] sm:$0xf]
        %v808 = vld [vmem:[%s1 + $0x238] sm:$0xf]
        %v809 = vld [vmem:[%s1 + $0x23c] sm:$0xf]
        %v954 = vunpack.c.l.b16 %v666
        %v955 = vunpack.c.l.b16 %v667
        %v956 = vunpack.c.l.b16 %v668
        %v957 = vunpack.c.l.b16 %v669
        %v958 = vunpack.c.l.b16 %v670
        %v959 = vunpack.c.l.b16 %v671
        %v960 = vunpack.c.l.b16 %v672
        %v961 = vunpack.c.l.b16 %v673
        %v962 = vunpack.c.l.b16 %v674
        %v963 = vunpack.c.l.b16 %v675
        %v964 = vunpack.c.l.b16 %v676
        %v965 = vunpack.c.l.b16 %v677
        %v966 = vunpack.c.l.b16 %v678
        %v967 = vunpack.c.l.b16 %v679
        %v968 = vunpack.c.l.b16 %v680
        %v969 = vunpack.c.l.b16 %v681
        %v970 = vunpack.c.l.b16 %v682
        %v971 = vunpack.c.l.b16 %v683
        %v972 = vunpack.c.l.b16 %v684
        %v973 = vunpack.c.l.b16 %v685
        %v974 = vunpack.c.l.b16 %v686
        %v975 = vunpack.c.l.b16 %v687
        %v976 = vunpack.c.l.b16 %v688
        %v977 = vunpack.c.l.b16 %v689
        %v978 = vunpack.c.l.b16 %v690
        %v979 = vunpack.c.l.b16 %v691
        %v980 = vunpack.c.l.b16 %v692
        %v981 = vunpack.c.l.b16 %v693
        %v982 = vunpack.c.l.b16 %v694
        %v983 = vunpack.c.l.b16 %v695
        %v984 = vunpack.c.l.b16 %v696
        %v985 = vunpack.c.l.b16 %v697
        %v986 = vunpack.c.l.b16 %v698
        %v987 = vunpack.c.l.b16 %v699
        %v988 = vunpack.c.l.b16 %v700
        %v989 = vunpack.c.l.b16 %v701
        %v990 = vunpack.c.l.b16 %v702
        %v991 = vunpack.c.l.b16 %v703
        %v992 = vunpack.c.l.b16 %v704
        %v993 = vunpack.c.l.b16 %v705
        %v994 = vunpack.c.l.b16 %v706
        %v995 = vunpack.c.l.b16 %v707
        %v996 = vunpack.c.l.b16 %v708
        %v997 = vunpack.c.l.b16 %v709
        %v998 = vunpack.c.l.b16 %v710
        %v999 = vunpack.c.l.b16 %v711
        %v1000 = vunpack.c.l.b16 %v712
        %v1001 = vunpack.c.l.b16 %v713
        %v1002 = vunpack.c.l.b16 %v714
        %v1003 = vunpack.c.l.b16 %v715
        %v1004 = vunpack.c.l.b16 %v716
        %v1005 = vunpack.c.l.b16 %v717
        %v1006 = vunpack.c.l.b16 %v718
        %v1007 = vunpack.c.l.b16 %v719
        %v1008 = vunpack.c.l.b16 %v720
        %v1009 = vunpack.c.l.b16 %v721
        %v1010 = vunpack.c.l.b16 %v722
        %v1011 = vunpack.c.l.b16 %v723
        %v1012 = vunpack.c.l.b16 %v724
        %v1013 = vunpack.c.l.b16 %v725
        %v1014 = vunpack.c.l.b16 %v726
        %v1015 = vunpack.c.l.b16 %v727
        %v1016 = vunpack.c.l.b16 %v728
        %v1017 = vunpack.c.l.b16 %v729
        %v1018 = vunpack.c.l.b16 %v730
        %v1019 = vunpack.c.l.b16 %v731
        %v1020 = vunpack.c.l.b16 %v732
        %v1021 = vunpack.c.l.b16 %v733
        %v1022 = vunpack.c.l.b16 %v734
        %v1023 = vunpack.c.l.b16 %v735
        %v1024 = vunpack.c.l.b16 %v736
        %v1025 = vunpack.c.l.b16 %v737
        %v1026 = vunpack.c.l.b16 %v738
        %v1027 = vunpack.c.l.b16 %v739
        %v1028 = vunpack.c.l.b16 %v740
        %v1029 = vunpack.c.l.b16 %v741
        %v1030 = vunpack.c.l.b16 %v742
        %v1031 = vunpack.c.l.b16 %v743
        %v1032 = vunpack.c.l.b16 %v744
        %v1033 = vunpack.c.l.b16 %v745
        %v1034 = vunpack.c.l.b16 %v746
        %v1035 = vunpack.c.l.b16 %v747
        %v1036 = vunpack.c.l.b16 %v748
        %v1037 = vunpack.c.l.b16 %v749
        %v1038 = vunpack.c.l.b16 %v750
        %v1039 = vunpack.c.l.b16 %v751
        %v1040 = vunpack.c.l.b16 %v752
        %v1041 = vunpack.c.l.b16 %v753
        %v1042 = vunpack.c.l.b16 %v754
        %v1043 = vunpack.c.l.b16 %v755
        %v1044 = vunpack.c.l.b16 %v756
        %v1045 = vunpack.c.l.b16 %v757
        %v1046 = vunpack.c.l.b16 %v758
        %v1047 = vunpack.c.l.b16 %v759
        %v1048 = vunpack.c.l.b16 %v760
        %v1049 = vunpack.c.l.b16 %v761
        %v1050 = vunpack.c.l.b16 %v762
        %v1051 = vunpack.c.l.b16 %v763
        %v1052 = vunpack.c.l.b16 %v764
        %v1053 = vunpack.c.l.b16 %v765
        %v1054 = vunpack.c.l.b16 %v766
        %v1055 = vunpack.c.l.b16 %v767
        %v1056 = vunpack.c.l.b16 %v768
        %v1057 = vunpack.c.l.b16 %v769
        %v1058 = vunpack.c.l.b16 %v770
        %v1059 = vunpack.c.l.b16 %v771
        %v1060 = vunpack.c.l.b16 %v772
        %v1061 = vunpack.c.l.b16 %v773
        %v1062 = vunpack.c.l.b16 %v774
        %v1063 = vunpack.c.l.b16 %v775
        %v1064 = vunpack.c.l.b16 %v776
        %v1065 = vunpack.c.l.b16 %v777
        %v1066 = vunpack.c.l.b16 %v778
        %v1067 = vunpack.c.l.b16 %v779
        %v1068 = vunpack.c.l.b16 %v780
        %v1069 = vunpack.c.l.b16 %v781
        %v1070 = vunpack.c.l.b16 %v782
        %v1071 = vunpack.c.l.b16 %v783
        %v1072 = vunpack.c.l.b16 %v784
        %v1073 = vunpack.c.l.b16 %v785
        %v1074 = vunpack.c.l.b16 %v786
        %v1075 = vunpack.c.l.b16 %v787
        %v1076 = vunpack.c.l.b16 %v788
        %v1077 = vunpack.c.l.b16 %v789
        %v1078 = vunpack.c.l.b16 %v790
        %v1079 = vunpack.c.l.b16 %v791
        %v1080 = vunpack.c.l.b16 %v792
        %v1081 = vunpack.c.l.b16 %v793
        %v1082 = vunpack.c.l.b16 %v794
        %v1083 = vunpack.c.l.b16 %v795
        %v1084 = vunpack.c.l.b16 %v796
        %v1085 = vunpack.c.l.b16 %v797
        %v1086 = vunpack.c.l.b16 %v798
        %v1087 = vunpack.c.l.b16 %v799
        %v1088 = vunpack.c.l.b16 %v800
        %v1089 = vunpack.c.l.b16 %v801
        %v1090 = vunpack.c.l.b16 %v802
        %v1091 = vunpack.c.l.b16 %v803
        %v1092 = vunpack.c.l.b16 %v804
        %v1093 = vunpack.c.l.b16 %v805
        %v1094 = vunpack.c.l.b16 %v806
        %v1095 = vunpack.c.l.b16 %v807
        %v1096 = vunpack.c.l.b16 %v808
        %v1097 = vunpack.c.l.b16 %v809
        %v1098 = vpack.c.b16 %v955, %v954
        %v1099 = vpack.c.b16 %v957, %v956
        %v1100 = vpack.c.b16 %v959, %v958
        %v1101 = vpack.c.b16 %v961, %v960
        %v1102 = vpack.c.b16 %v963, %v962
        %v1103 = vpack.c.b16 %v965, %v964
        %v1104 = vpack.c.b16 %v967, %v966
        %v1105 = vpack.c.b16 %v969, %v968
        %v1106 = vpack.c.b16 %v971, %v970
        %v1107 = vpack.c.b16 %v973, %v972
        %v1108 = vpack.c.b16 %v975, %v974
        %v1109 = vpack.c.b16 %v977, %v976
        %v1110 = vpack.c.b16 %v979, %v978
        %v1111 = vpack.c.b16 %v981, %v980
        %v1112 = vpack.c.b16 %v983, %v982
        %v1113 = vpack.c.b16 %v985, %v984
        %v1114 = vpack.c.b16 %v987, %v986
        %v1115 = vpack.c.b16 %v989, %v988
        %v1116 = vpack.c.b16 %v991, %v990
        %v1117 = vpack.c.b16 %v993, %v992
        %v1118 = vpack.c.b16 %v995, %v994
        %v1119 = vpack.c.b16 %v997, %v996
        %v1120 = vpack.c.b16 %v999, %v998
        %v1121 = vpack.c.b16 %v1001, %v1000
        %v1122 = vpack.c.b16 %v1003, %v1002
        %v1123 = vpack.c.b16 %v1005, %v1004
        %v1124 = vpack.c.b16 %v1007, %v1006
        %v1125 = vpack.c.b16 %v1009, %v1008
        %v1126 = vpack.c.b16 %v1011, %v1010
        %v1127 = vpack.c.b16 %v1013, %v1012
        %v1128 = vpack.c.b16 %v1015, %v1014
        %v1129 = vpack.c.b16 %v1017, %v1016
        %v1130 = vpack.c.b16 %v1019, %v1018
        %v1131 = vpack.c.b16 %v1021, %v1020
        %v1132 = vpack.c.b16 %v1023, %v1022
        %v1133 = vpack.c.b16 %v1025, %v1024
        %v1134 = vpack.c.b16 %v1027, %v1026
        %v1135 = vpack.c.b16 %v1029, %v1028
        %v1136 = vpack.c.b16 %v1031, %v1030
        %v1137 = vpack.c.b16 %v1033, %v1032
        %v1138 = vpack.c.b16 %v1035, %v1034
        %v1139 = vpack.c.b16 %v1037, %v1036
        %v1140 = vpack.c.b16 %v1039, %v1038
        %v1141 = vpack.c.b16 %v1041, %v1040
        %v1142 = vpack.c.b16 %v1043, %v1042
        %v1143 = vpack.c.b16 %v1045, %v1044
        %v1144 = vpack.c.b16 %v1047, %v1046
        %v1145 = vpack.c.b16 %v1049, %v1048
        %v1146 = vpack.c.b16 %v1051, %v1050
        %v1147 = vpack.c.b16 %v1053, %v1052
        %v1148 = vpack.c.b16 %v1055, %v1054
        %v1149 = vpack.c.b16 %v1057, %v1056
        %v1150 = vpack.c.b16 %v1059, %v1058
        %v1151 = vpack.c.b16 %v1061, %v1060
        %v1152 = vpack.c.b16 %v1063, %v1062
        %v1153 = vpack.c.b16 %v1065, %v1064
        %v1154 = vpack.c.b16 %v1067, %v1066
        %v1155 = vpack.c.b16 %v1069, %v1068
        %v1156 = vpack.c.b16 %v1071, %v1070
        %v1157 = vpack.c.b16 %v1073, %v1072
        %v1158 = vpack.c.b16 %v1075, %v1074
        %v1159 = vpack.c.b16 %v1077, %v1076
        %v1160 = vpack.c.b16 %v1079, %v1078
        %v1161 = vpack.c.b16 %v1081, %v1080
        %v1162 = vpack.c.b16 %v1083, %v1082
        %v1163 = vpack.c.b16 %v1085, %v1084
        %v1164 = vpack.c.b16 %v1087, %v1086
        %v1165 = vpack.c.b16 %v1089, %v1088
        %v1166 = vpack.c.b16 %v1091, %v1090
        %v1167 = vpack.c.b16 %v1093, %v1092
        %v1168 = vpack.c.b16 %v1095, %v1094
        %v1169 = vpack.c.b16 %v1097, %v1096
        %1242 = vmatprep.subr.bf16.mxu0 0
        %1243 = vmatpush1.bf16.msra.mxu0 %v1098
        %1244 = vmatprep.subr.bf16.mxu0 0
        %1245 = vmatpush1.bf16.msra.mxu0 %v1099
        %1246 = vmatprep.subr.bf16.mxu0 0
        %1247 = vmatpush1.bf16.msra.mxu0 %v1100
        %1248 = vmatprep.subr.bf16.mxu0 0
        %1249 = vmatpush1.bf16.msra.mxu0 %v1101
        %1250 = vmatprep.subr.bf16.mxu0 0
        %1251 = vmatpush1.bf16.msra.mxu0 %v1102
        %1252 = vmatprep.subr.bf16.mxu0 0
        %1253 = vmatpush1.bf16.msra.mxu0 %v1103
        %1254 = vmatprep.subr.bf16.mxu0 0
        %1255 = vmatpush1.bf16.msra.mxu0 %v1104
        %1256 = vmatprep.subr.bf16.mxu0 0
        %1257 = vmatpush1.bf16.msra.mxu0 %v1105
        %1258 = vmatprep.subr.bf16.mxu0 0
        %1259 = vmatpush1.bf16.msra.mxu0 %v1106
        %1260 = vmatprep.subr.bf16.mxu0 0
        %1261 = vmatpush1.bf16.msra.mxu0 %v1107
        %1262 = vmatprep.subr.bf16.mxu0 0
        %1263 = vmatpush1.bf16.msra.mxu0 %v1108
        %1264 = vmatprep.subr.bf16.mxu0 0
        %1265 = vmatpush1.bf16.msra.mxu0 %v1109
        %1266 = vmatprep.subr.bf16.mxu0 0
        %1267 = vmatpush1.bf16.msra.mxu0 %v1110
        %1268 = vmatprep.subr.bf16.mxu0 0
        %1269 = vmatpush1.bf16.msra.mxu0 %v1111
        %1270 = vmatprep.subr.bf16.mxu0 0
        %1271 = vmatpush1.bf16.msra.mxu0 %v1112
        %1272 = vmatprep.subr.bf16.mxu0 0
        %1273 = vmatpush1.bf16.msra.mxu0 %v1113
        %1274 = vmatprep.mubr.bf16.mxu0 %v312
        %1275 = vmatmul.mubr.bf16.gmra.mrb[0].mxu0 %v264
        %v1276 = vpop.f32.mrb[0].mxu0
        %v1277 = vadd.f32 0.0, %v1276
        %v1278 = vpop.f32.mrb[0].mxu0
        %v1279 = vpop.f32.mrb[0].mxu0
        %v1280 = vadd.f32 0.0, %v1279
        %v1281 = vpop.f32.mrb[0].mxu0
        %1282 = vmatprep.mubr.bf16.mxu0 %v313
        %1283 = vmatmul.mubr.bf16.gmra.mrb[0].mxu0 %v265
        %v1284 = vpop.f32.mrb[0].mxu0
        %v1285 = vadd.f32 0.0, %v1284
        %v1286 = vpop.f32.mrb[0].mxu0
        %v1287 = vpop.f32.mrb[0].mxu0
        %v1288 = vadd.f32 0.0, %v1287
        %v1289 = vpop.f32.mrb[0].mxu0
        %1290 = vmatprep.mubr.bf16.mxu0 %v314
        %1291 = vmatmul.mubr.bf16.gmra.mrb[0].mxu0 %v266
        %v1292 = vpop.f32.mrb[0].mxu0
        %v1293 = vadd.f32 0.0, %v1292
        %v1294 = vpop.f32.mrb[0].mxu0
        %v1295 = vpop.f32.mrb[0].mxu0
        %v1296 = vadd.f32 0.0, %v1295
        %v1297 = vpop.f32.mrb[0].mxu0
        %1298 = vmatprep.mubr.bf16.mxu0 %v315
        %1299 = vmatmul.mubr.bf16.gmra.mrb[0].mxu0 %v267
        %v1300 = vpop.f32.mrb[0].mxu0
        %v1301 = vadd.f32 0.0, %v1300
        %v1302 = vpop.f32.mrb[0].mxu0
        %v1303 = vpop.f32.mrb[0].mxu0
        %v1304 = vadd.f32 0.0, %v1303
        %v1305 = vpop.f32.mrb[0].mxu0
        %1306 = vmatprep.mubr.bf16.mxu0 %v316
        %1307 = vmatmul.mubr.bf16.gmra.mrb[0].mxu0 %v268
        %v1308 = vpop.f32.mrb[0].mxu0
        %v1309 = vadd.f32 0.0, %v1308
        %v1310 = vpop.f32.mrb[0].mxu0
        %v1311 = vpop.f32.mrb[0].mxu0
        %v1312 = vadd.f32 0.0, %v1311
        %v1313 = vpop.f32.mrb[0].mxu0
        %1314 = vmatprep.mubr.bf16.mxu0 %v317
        %1315 = vmatmul.mubr.bf16.gmra.mrb[0].mxu0 %v269
        %v1316 = vpop.f32.mrb[0].mxu0
        %v1317 = vadd.f32 0.0, %v1316
        %v1318 = vpop.f32.mrb[0].mxu0
        %v1319 = vpop.f32.mrb[0].mxu0
        %v1320 = vadd.f32 0.0, %v1319
        %v1321 = vpop.f32.mrb[0].mxu0
        %1322 = vmatprep.mubr.bf16.mxu0 %v318
        %1323 = vmatmul.mubr.bf16.gmra.mrb[0].mxu0 %v270
        %v1324 = vpop.f32.mrb[0].mxu0
        %v1325 = vadd.f32 0.0, %v1324
        %v1326 = vpop.f32.mrb[0].mxu0
        %v1327 = vpop.f32.mrb[0].mxu0
        %v1328 = vadd.f32 0.0, %v1327
        %v1329 = vpop.f32.mrb[0].mxu0
        %1330 = vmatprep.mubr.bf16.mxu0 %v319
        %1331 = vmatmul.mubr.bf16.gmra.mrb[0].mxu0 %v271
        %v1332 = vpop.f32.mrb[0].mxu0
        %v1333 = vadd.f32 0.0, %v1332
        %v1334 = vpop.f32.mrb[0].mxu0
        %v1335 = vpop.f32.mrb[0].mxu0
        %v1336 = vadd.f32 0.0, %v1335
        %v1337 = vpop.f32.mrb[0].mxu0
        %1338 = vmatprep.mubr.bf16.mxu0 %v320
        %1339 = vmatmul.mubr.bf16.gmra.mrb[0].mxu0 %v272
        %v1340 = vpop.f32.mrb[0].mxu0
        %v1341 = vadd.f32 0.0, %v1340
        %v1342 = vpop.f32.mrb[0].mxu0
        %v1343 = vpop.f32.mrb[0].mxu0
        %v1344 = vadd.f32 0.0, %v1343
        %v1345 = vpop.f32.mrb[0].mxu0
        %1346 = vmatprep.mubr.bf16.mxu0 %v321
        %1347 = vmatmul.mubr.bf16.gmra.mrb[0].mxu0 %v273
        %v1348 = vpop.f32.mrb[0].mxu0
        %v1349 = vadd.f32 0.0, %v1348
        %v1350 = vpop.f32.mrb[0].mxu0
        %v1351 = vpop.f32.mrb[0].mxu0
        %v1352 = vadd.f32 0.0, %v1351
        %v1353 = vpop.f32.mrb[0].mxu0
        %1354 = vmatprep.mubr.bf16.mxu0 %v322
        %1355 = vmatmul.mubr.bf16.gmra.mrb[0].mxu0 %v274
        %v1356 = vpop.f32.mrb[0].mxu0
        %v1357 = vadd.f32 0.0, %v1356
        %v1358 = vpop.f32.mrb[0].mxu0
        %v1359 = vpop.f32.mrb[0].mxu0
        %v1360 = vadd.f32 0.0, %v1359
        %v1361 = vpop.f32.mrb[0].mxu0
        %1362 = vmatprep.mubr.bf16.mxu0 %v323
        %1363 = vmatmul.mubr.bf16.gmra.mrb[0].mxu0 %v275
        %v1364 = vpop.f32.mrb[0].mxu0
        %v1365 = vadd.f32 0.0, %v1364
        %v1366 = vpop.f32.mrb[0].mxu0
        %v1367 = vpop.f32.mrb[0].mxu0
        %v1368 = vadd.f32 0.0, %v1367
        %v1369 = vpop.f32.mrb[0].mxu0
        %1370 = vmatprep.mubr.bf16.mxu0 %v324
        %1371 = vmatmul.mubr.bf16.gmra.mrb[0].mxu0 %v276
        %v1372 = vpop.f32.mrb[0].mxu0
        %v1373 = vadd.f32 0.0, %v1372
        %v1374 = vpop.f32.mrb[0].mxu0
        %v1375 = vpop.f32.mrb[0].mxu0
        %v1376 = vadd.f32 0.0, %v1375
        %v1377 = vpop.f32.mrb[0].mxu0
        %1378 = vmatprep.mubr.bf16.mxu0 %v325
        %1379 = vmatmul.mubr.bf16.gmra.mrb[0].mxu0 %v277
        %v1380 = vpop.f32.mrb[0].mxu0
        %v1381 = vadd.f32 0.0, %v1380
        %v1382 = vpop.f32.mrb[0].mxu0
        %v1383 = vpop.f32.mrb[0].mxu0
        %v1384 = vadd.f32 0.0, %v1383
        %v1385 = vpop.f32.mrb[0].mxu0
        %1386 = vmatprep.mubr.bf16.mxu0 %v326
        %1387 = vmatmul.mubr.bf16.gmra.mrb[0].mxu0 %v278
        %v1388 = vpop.f32.mrb[0].mxu0
        %v1389 = vadd.f32 0.0, %v1388
        %v1390 = vpop.f32.mrb[0].mxu0
        %v1391 = vpop.f32.mrb[0].mxu0
        %v1392 = vadd.f32 0.0, %v1391
        %v1393 = vpop.f32.mrb[0].mxu0
        %1394 = vmatprep.mubr.bf16.mxu0 %v327
        %1395 = vmatmul.mubr.bf16.gmra.mrb[0].mxu0 %v279
        %v1396 = vpop.f32.mrb[0].mxu0
        %v1397 = vadd.f32 0.0, %v1396
        %v1398 = vpop.f32.mrb[0].mxu0
        %v1399 = vpop.f32.mrb[0].mxu0
        %v1400 = vadd.f32 0.0, %v1399
        %v1401 = vpop.f32.mrb[0].mxu0
        %1402 = vdwg.mxu0
        %1403 = vmatprep.subr.bf16.mxu0 0
        %1404 = vmatpush1.bf16.msra.mxu0 %v1114
        %1405 = vmatprep.subr.bf16.mxu0 0
        %1406 = vmatpush1.bf16.msra.mxu0 %v1115
        %1407 = vmatprep.subr.bf16.mxu0 0
        %1408 = vmatpush1.bf16.msra.mxu0 %v1116
        %1409 = vmatprep.subr.bf16.mxu0 0
        %1410 = vmatpush1.bf16.msra.mxu0 %v1117
        %1411 = vmatprep.subr.bf16.mxu0 0
        %1412 = vmatpush1.bf16.msra.mxu0 %v1118
        %1413 = vmatprep.subr.bf16.mxu0 0
        %1414 = vmatpush1.bf16.msra.mxu0 %v1119
        %1415 = vmatprep.subr.bf16.mxu0 0
        %1416 = vmatpush1.bf16.msra.mxu0 %v1120
        %1417 = vmatprep.subr.bf16.mxu0 0
        %1418 = vmatpush1.bf16.msra.mxu0 %v1121
        %1419 = vmatprep.subr.bf16.mxu0 0
        %1420 = vmatpush1.bf16.msra.mxu0 %v1122
        %1421 = vmatprep.subr.bf16.mxu0 0
        %1422 = vmatpush1.bf16.msra.mxu0 %v1123
        %1423 = vmatprep.subr.bf16.mxu0 0
        %1424 = vmatpush1.bf16.msra.mxu0 %v1124
        %1425 = vmatprep.subr.bf16.mxu0 0
        %1426 = vmatpush1.bf16.msra.mxu0 %v1125
        %1427 = vmatprep.subr.bf16.mxu0 0
        %1428 = vmatpush1.bf16.msra.mxu0 %v1126
        %1429 = vmatprep.subr.bf16.mxu0 0
        %1430 = vmatpush1.bf16.msra.mxu0 %v1127
        %1431 = vmatprep.subr.bf16.mxu0 0
        %1432 = vmatpush1.bf16.msra.mxu0 %v1128
        %1433 = vmatprep.subr.bf16.mxu0 0
        %1434 = vmatpush1.bf16.msra.mxu0 %v1129
        %1435 = vmatprep.mubr.bf16.mxu0 %v409
        %1436 = vmatmul.mubr.bf16.gmra.mrb[0].mxu0 %v360
        %v1437 = vpop.f32.mrb[0].mxu0
        %v1438 = vadd.f32 %v1277, %v1437
        %v1439 = vpop.f32.mrb[0].mxu0
        %v1440 = vpop.f32.mrb[0].mxu0
        %v1441 = vadd.f32 %v1280, %v1440
        %v1442 = vpop.f32.mrb[0].mxu0
        %1443 = vmatprep.mubr.bf16.mxu0 %v410
        %1444 = vmatmul.mubr.bf16.gmra.mrb[0].mxu0 %v361
        %v1445 = vpop.f32.mrb[0].mxu0
        %v1446 = vadd.f32 %v1285, %v1445
        %v1447 = vpop.f32.mrb[0].mxu0
        %v1448 = vpop.f32.mrb[0].mxu0
        %v1449 = vadd.f32 %v1288, %v1448
        %v1450 = vpop.f32.mrb[0].mxu0
        %1451 = vmatprep.mubr.bf16.mxu0 %v411
        %1452 = vmatmul.mubr.bf16.gmra.mrb[0].mxu0 %v362
        %v1453 = vpop.f32.mrb[0].mxu0
        %v1454 = vadd.f32 %v1293, %v1453
        %v1455 = vpop.f32.mrb[0].mxu0
        %v1456 = vpop.f32.mrb[0].mxu0
        %v1457 = vadd.f32 %v1296, %v1456
        %v1458 = vpop.f32.mrb[0].mxu0
        %1459 = vmatprep.mubr.bf16.mxu0 %v412
        %1460 = vmatmul.mubr.bf16.gmra.mrb[0].mxu0 %v363
        %v1461 = vpop.f32.mrb[0].mxu0
        %v1462 = vadd.f32 %v1301, %v1461
        %v1463 = vpop.f32.mrb[0].mxu0
        %v1464 = vpop.f32.mrb[0].mxu0
        %v1465 = vadd.f32 %v1304, %v1464
        %v1466 = vpop.f32.mrb[0].mxu0
        %1467 = vmatprep.mubr.bf16.mxu0 %v413
        %1468 = vmatmul.mubr.bf16.gmra.mrb[0].mxu0 %v364
        %v1469 = vpop.f32.mrb[0].mxu0
        %v1470 = vadd.f32 %v1309, %v1469
        %v1471 = vpop.f32.mrb[0].mxu0
        %v1472 = vpop.f32.mrb[0].mxu0
        %v1473 = vadd.f32 %v1312, %v1472
        %v1474 = vpop.f32.mrb[0].mxu0
        %1475 = vmatprep.mubr.bf16.mxu0 %v414
        %1476 = vmatmul.mubr.bf16.gmra.mrb[0].mxu0 %v365
        %v1477 = vpop.f32.mrb[0].mxu0
        %v1478 = vadd.f32 %v1317, %v1477
        %v1479 = vpop.f32.mrb[0].mxu0
        %v1480 = vpop.f32.mrb[0].mxu0
        %v1481 = vadd.f32 %v1320, %v1480
        %v1482 = vpop.f32.mrb[0].mxu0
        %1483 = vmatprep.mubr.bf16.mxu0 %v415
        %1484 = vmatmul.mubr.bf16.gmra.mrb[0].mxu0 %v366
        %v1485 = vpop.f32.mrb[0].mxu0
        %v1486 = vadd.f32 %v1325, %v1485
        %v1487 = vpop.f32.mrb[0].mxu0
        %v1488 = vpop.f32.mrb[0].mxu0
        %v1489 = vadd.f32 %v1328, %v1488
        %v1490 = vpop.f32.mrb[0].mxu0
        %1491 = vmatprep.mubr.bf16.mxu0 %v416
        %1492 = vmatmul.mubr.bf16.gmra.mrb[0].mxu0 %v367
        %v1493 = vpop.f32.mrb[0].mxu0
        %v1494 = vadd.f32 %v1333, %v1493
        %v1495 = vpop.f32.mrb[0].mxu0
        %v1496 = vpop.f32.mrb[0].mxu0
        %v1497 = vadd.f32 %v1336, %v1496
        %v1498 = vpop.f32.mrb[0].mxu0
        %1499 = vmatprep.mubr.bf16.mxu0 %v417
        %1500 = vmatmul.mubr.bf16.gmra.mrb[0].mxu0 %v368
        %v1501 = vpop.f32.mrb[0].mxu0
        %v1502 = vadd.f32 %v1341, %v1501
        %v1503 = vpop.f32.mrb[0].mxu0
        %v1504 = vpop.f32.mrb[0].mxu0
        %v1505 = vadd.f32 %v1344, %v1504
        %v1506 = vpop.f32.mrb[0].mxu0
        %1507 = vmatprep.mubr.bf16.mxu0 %v418
        %1508 = vmatmul.mubr.bf16.gmra.mrb[0].mxu0 %v369
        %v1509 = vpop.f32.mrb[0].mxu0
        %v1510 = vadd.f32 %v1349, %v1509
        %v1511 = vpop.f32.mrb[0].mxu0
        %v1512 = vpop.f32.mrb[0].mxu0
        %v1513 = vadd.f32 %v1352, %v1512
        %v1514 = vpop.f32.mrb[0].mxu0
        %1515 = vmatprep.mubr.bf16.mxu0 %v419
        %1516 = vmatmul.mubr.bf16.gmra.mrb[0].mxu0 %v370
        %v1517 = vpop.f32.mrb[0].mxu0
        %v1518 = vadd.f32 %v1357, %v1517
        %v1519 = vpop.f32.mrb[0].mxu0
        %v1520 = vpop.f32.mrb[0].mxu0
        %v1521 = vadd.f32 %v1360, %v1520
        %v1522 = vpop.f32.mrb[0].mxu0
        %1523 = vmatprep.mubr.bf16.mxu0 %v420
        %1524 = vmatmul.mubr.bf16.gmra.mrb[0].mxu0 %v371
        %v1525 = vpop.f32.mrb[0].mxu0
        %v1526 = vadd.f32 %v1365, %v1525
        %v1527 = vpop.f32.mrb[0].mxu0
        %v1528 = vpop.f32.mrb[0].mxu0
        %v1529 = vadd.f32 %v1368, %v1528
        %v1530 = vpop.f32.mrb[0].mxu0
        %1531 = vmatprep.mubr.bf16.mxu0 %v421
        %1532 = vmatmul.mubr.bf16.gmra.mrb[0].mxu0 %v372
        %v1533 = vpop.f32.mrb[0].mxu0
        %v1534 = vadd.f32 %v1373, %v1533
        %v1535 = vpop.f32.mrb[0].mxu0
        %v1536 = vpop.f32.mrb[0].mxu0
        %v1537 = vadd.f32 %v1376, %v1536
        %v1538 = vpop.f32.mrb[0].mxu0
        %1539 = vmatprep.mubr.bf16.mxu0 %v422
        %1540 = vmatmul.mubr.bf16.gmra.mrb[0].mxu0 %v373
        %v1541 = vpop.f32.mrb[0].mxu0
        %v1542 = vadd.f32 %v1381, %v1541
        %v1543 = vpop.f32.mrb[0].mxu0
        %v1544 = vpop.f32.mrb[0].mxu0
        %v1545 = vadd.f32 %v1384, %v1544
        %v1546 = vpop.f32.mrb[0].mxu0
        %1547 = vmatprep.mubr.bf16.mxu0 %v423
        %1548 = vmatmul.mubr.bf16.gmra.mrb[0].mxu0 %v374
        %v1549 = vpop.f32.mrb[0].mxu0
        %v1550 = vadd.f32 %v1389, %v1549
        %v1551 = vpop.f32.mrb[0].mxu0
        %v1552 = vpop.f32.mrb[0].mxu0
        %v1553 = vadd.f32 %v1392, %v1552
        %v1554 = vpop.f32.mrb[0].mxu0
        %1555 = vmatprep.mubr.bf16.mxu0 %v424
        %1556 = vmatmul.mubr.bf16.gmra.mrb[0].mxu0 %v375
        %v1557 = vpop.f32.mrb[0].mxu0
        %v1558 = vadd.f32 %v1397, %v1557
        %v1559 = vpop.f32.mrb[0].mxu0
        %v1560 = vpop.f32.mrb[0].mxu0
        %v1561 = vadd.f32 %v1400, %v1560
        %v1562 = vpop.f32.mrb[0].mxu0
        %1563 = vdwg.mxu0
        %1564 = vmatprep.subr.bf16.mxu0 0
        %1565 = vmatpush1.bf16.msra.mxu0 %v1130
        %1566 = vmatprep.subr.bf16.mxu0 0
        %1567 = vmatpush1.bf16.msra.mxu0 %v1131
        %1568 = vmatprep.subr.bf16.mxu0 0
        %1569 = vmatpush1.bf16.msra.mxu0 %v1132
        %1570 = vmatprep.subr.bf16.mxu0 0
        %1571 = vmatpush1.bf16.msra.mxu0 %v1133
        %1572 = vmatprep.subr.bf16.mxu0 0
        %1573 = vmatpush1.bf16.msra.mxu0 %v1134
        %1574 = vmatprep.subr.bf16.mxu0 0
        %1575 = vmatpush1.bf16.msra.mxu0 %v1135
        %1576 = vmatprep.subr.bf16.mxu0 0
        %1577 = vmatpush1.bf16.msra.mxu0 %v1136
        %1578 = vmatprep.subr.bf16.mxu0 0
        %1579 = vmatpush1.bf16.msra.mxu0 %v1137
        %1580 = vmatprep.subr.bf16.mxu0 0
        %1581 = vmatpush1.bf16.msra.mxu0 %v1138
        %1582 = vmatprep.subr.bf16.mxu0 0
        %1583 = vmatpush1.bf16.msra.mxu0 %v1139
        %1584 = vmatprep.subr.bf16.mxu0 0
        %1585 = vmatpush1.bf16.msra.mxu0 %v1140
        %1586 = vmatprep.subr.bf16.mxu0 0
        %1587 = vmatpush1.bf16.msra.mxu0 %v1141
        %1588 = vmatprep.subr.bf16.mxu0 0
        %1589 = vmatpush1.bf16.msra.mxu0 %v1142
        %1590 = vmatprep.subr.bf16.mxu0 0
        %1591 = vmatpush1.bf16.msra.mxu0 %v1143
        %1592 = vmatprep.subr.bf16.mxu0 0
        %1593 = vmatpush1.bf16.msra.mxu0 %v1144
        %1594 = vmatprep.subr.bf16.mxu0 0
        %1595 = vmatpush1.bf16.msra.mxu0 %v1145
        %1596 = vmatprep.mubr.bf16.mxu0 %v505
        %1597 = vmatmul.mubr.bf16.gmra.mrb[0].mxu0 %v457
        %v1598 = vpop.f32.mrb[0].mxu0
        %v1599 = vadd.f32 %v1438, %v1598
        %v1600 = vpop.f32.mrb[0].mxu0
        %v1601 = vpop.f32.mrb[0].mxu0
        %v1602 = vadd.f32 %v1441, %v1601
        %v1603 = vpop.f32.mrb[0].mxu0
        %1604 = vmatprep.mubr.bf16.mxu0 %v506
        %1605 = vmatmul.mubr.bf16.gmra.mrb[0].mxu0 %v458
        %v1606 = vpop.f32.mrb[0].mxu0
        %v1607 = vadd.f32 %v1446, %v1606
        %v1608 = vpop.f32.mrb[0].mxu0
        %v1609 = vpop.f32.mrb[0].mxu0
        %v1610 = vadd.f32 %v1449, %v1609
        %v1611 = vpop.f32.mrb[0].mxu0
        %1612 = vmatprep.mubr.bf16.mxu0 %v507
        %1613 = vmatmul.mubr.bf16.gmra.mrb[0].mxu0 %v459
        %v1614 = vpop.f32.mrb[0].mxu0
        %v1615 = vadd.f32 %v1454, %v1614
        %v1616 = vpop.f32.mrb[0].mxu0
        %v1617 = vpop.f32.mrb[0].mxu0
        %v1618 = vadd.f32 %v1457, %v1617
        %v1619 = vpop.f32.mrb[0].mxu0
        %1620 = vmatprep.mubr.bf16.mxu0 %v508
        %1621 = vmatmul.mubr.bf16.gmra.mrb[0].mxu0 %v460
        %v1622 = vpop.f32.mrb[0].mxu0
        %v1623 = vadd.f32 %v1462, %v1622
        %v1624 = vpop.f32.mrb[0].mxu0
        %v1625 = vpop.f32.mrb[0].mxu0
        %v1626 = vadd.f32 %v1465, %v1625
        %v1627 = vpop.f32.mrb[0].mxu0
        %1628 = vmatprep.mubr.bf16.mxu0 %v509
        %1629 = vmatmul.mubr.bf16.gmra.mrb[0].mxu0 %v461
        %v1630 = vpop.f32.mrb[0].mxu0
        %v1631 = vadd.f32 %v1470, %v1630
        %v1632 = vpop.f32.mrb[0].mxu0
        %v1633 = vpop.f32.mrb[0].mxu0
        %v1634 = vadd.f32 %v1473, %v1633
        %v1635 = vpop.f32.mrb[0].mxu0
        %1636 = vmatprep.mubr.bf16.mxu0 %v510
        %1637 = vmatmul.mubr.bf16.gmra.mrb[0].mxu0 %v462
        %v1638 = vpop.f32.mrb[0].mxu0
        %v1639 = vadd.f32 %v1478, %v1638
        %v1640 = vpop.f32.mrb[0].mxu0
        %v1641 = vpop.f32.mrb[0].mxu0
        %v1642 = vadd.f32 %v1481, %v1641
        %v1643 = vpop.f32.mrb[0].mxu0
        %1644 = vmatprep.mubr.bf16.mxu0 %v511
        %1645 = vmatmul.mubr.bf16.gmra.mrb[0].mxu0 %v463
        %v1646 = vpop.f32.mrb[0].mxu0
        %v1647 = vadd.f32 %v1486, %v1646
        %v1648 = vpop.f32.mrb[0].mxu0
        %v1649 = vpop.f32.mrb[0].mxu0
        %v1650 = vadd.f32 %v1489, %v1649
        %v1651 = vpop.f32.mrb[0].mxu0
        %1652 = vmatprep.mubr.bf16.mxu0 %v512
        %1653 = vmatmul.mubr.bf16.gmra.mrb[0].mxu0 %v464
        %v1654 = vpop.f32.mrb[0].mxu0
        %v1655 = vadd.f32 %v1494, %v1654
        %v1656 = vpop.f32.mrb[0].mxu0
        %v1657 = vpop.f32.mrb[0].mxu0
        %v1658 = vadd.f32 %v1497, %v1657
        %v1659 = vpop.f32.mrb[0].mxu0
        %1660 = vmatprep.mubr.bf16.mxu0 %v513
        %1661 = vmatmul.mubr.bf16.gmra.mrb[0].mxu0 %v465
        %v1662 = vpop.f32.mrb[0].mxu0
        %v1663 = vadd.f32 %v1502, %v1662
        %v1664 = vpop.f32.mrb[0].mxu0
        %v1665 = vpop.f32.mrb[0].mxu0
        %v1666 = vadd.f32 %v1505, %v1665
        %v1667 = vpop.f32.mrb[0].mxu0
        %1668 = vmatprep.mubr.bf16.mxu0 %v514
        %1669 = vmatmul.mubr.bf16.gmra.mrb[0].mxu0 %v466
        %v1670 = vpop.f32.mrb[0].mxu0
        %v1671 = vadd.f32 %v1510, %v1670
        %v1672 = vpop.f32.mrb[0].mxu0
        %v1673 = vpop.f32.mrb[0].mxu0
        %v1674 = vadd.f32 %v1513, %v1673
        %v1675 = vpop.f32.mrb[0].mxu0
        %1676 = vmatprep.mubr.bf16.mxu0 %v515
        %1677 = vmatmul.mubr.bf16.gmra.mrb[0].mxu0 %v467
        %v1678 = vpop.f32.mrb[0].mxu0
        %v1679 = vadd.f32 %v1518, %v1678
        %v1680 = vpop.f32.mrb[0].mxu0
        %v1681 = vpop.f32.mrb[0].mxu0
        %v1682 = vadd.f32 %v1521, %v1681
        %v1683 = vpop.f32.mrb[0].mxu0
        %1684 = vmatprep.mubr.bf16.mxu0 %v516
        %1685 = vmatmul.mubr.bf16.gmra.mrb[0].mxu0 %v468
        %v1686 = vpop.f32.mrb[0].mxu0
        %v1687 = vadd.f32 %v1526, %v1686
        %v1688 = vpop.f32.mrb[0].mxu0
        %v1689 = vpop.f32.mrb[0].mxu0
        %v1690 = vadd.f32 %v1529, %v1689
        %v1691 = vpop.f32.mrb[0].mxu0
        %1692 = vmatprep.mubr.bf16.mxu0 %v517
        %1693 = vmatmul.mubr.bf16.gmra.mrb[0].mxu0 %v469
        %v1694 = vpop.f32.mrb[0].mxu0
        %v1695 = vadd.f32 %v1534, %v1694
        %v1696 = vpop.f32.mrb[0].mxu0
        %v1697 = vpop.f32.mrb[0].mxu0
        %v1698 = vadd.f32 %v1537, %v1697
        %v1699 = vpop.f32.mrb[0].mxu0
        %1700 = vmatprep.mubr.bf16.mxu0 %v518
        %1701 = vmatmul.mubr.bf16.gmra.mrb[0].mxu0 %v470
        %v1702 = vpop.f32.mrb[0].mxu0
        %v1703 = vadd.f32 %v1542, %v1702
        %v1704 = vpop.f32.mrb[0].mxu0
        %v1705 = vpop.f32.mrb[0].mxu0
        %v1706 = vadd.f32 %v1545, %v1705
        %v1707 = vpop.f32.mrb[0].mxu0
        %1708 = vmatprep.mubr.bf16.mxu0 %v519
        %1709 = vmatmul.mubr.bf16.gmra.mrb[0].mxu0 %v471
        %v1710 = vpop.f32.mrb[0].mxu0
        %v1711 = vadd.f32 %v1550, %v1710
        %v1712 = vpop.f32.mrb[0].mxu0
        %v1713 = vpop.f32.mrb[0].mxu0
        %v1714 = vadd.f32 %v1553, %v1713
        %v1715 = vpop.f32.mrb[0].mxu0
        %1716 = vmatprep.mubr.bf16.mxu0 %v520
        %1717 = vmatmul.mubr.bf16.gmra.mrb[0].mxu0 %v472
        %v1718 = vpop.f32.mrb[0].mxu0
        %v1719 = vadd.f32 %v1558, %v1718
        %v1720 = vpop.f32.mrb[0].mxu0
        %v1721 = vpop.f32.mrb[0].mxu0
        %v1722 = vadd.f32 %v1561, %v1721
        %v1723 = vpop.f32.mrb[0].mxu0
        %1724 = vdwg.mxu0
        %1725 = vmatprep.subr.bf16.mxu0 0
        %1726 = vmatpush1.bf16.msra.mxu0 %v1146
        %1727 = vmatprep.subr.bf16.mxu0 0
        %1728 = vmatpush1.bf16.msra.mxu0 %v1147
        %1729 = vmatprep.subr.bf16.mxu0 0
        %1730 = vmatpush1.bf16.msra.mxu0 %v1148
        %1731 = vmatprep.subr.bf16.mxu0 0
        %1732 = vmatpush1.bf16.msra.mxu0 %v1149
        %1733 = vmatprep.subr.bf16.mxu0 0
        %1734 = vmatpush1.bf16.msra.mxu0 %v1150
        %1735 = vmatprep.subr.bf16.mxu0 0
        %1736 = vmatpush1.bf16.msra.mxu0 %v1151
        %1737 = vmatprep.subr.bf16.mxu0 0
        %1738 = vmatpush1.bf16.msra.mxu0 %v1152
        %1739 = vmatprep.subr.bf16.mxu0 0
        %1740 = vmatpush1.bf16.msra.mxu0 %v1153
        %1741 = vmatprep.subr.bf16.mxu0 0
        %1742 = vmatpush1.bf16.msra.mxu0 %v1154
        %1743 = vmatprep.subr.bf16.mxu0 0
        %1744 = vmatpush1.bf16.msra.mxu0 %v1155
        %1745 = vmatprep.subr.bf16.mxu0 0
        %1746 = vmatpush1.bf16.msra.mxu0 %v1156
        %1747 = vmatprep.subr.bf16.mxu0 0
        %1748 = vmatpush1.bf16.msra.mxu0 %v1157
        %1749 = vmatprep.subr.bf16.mxu0 0
        %1750 = vmatpush1.bf16.msra.mxu0 %v1158
        %1751 = vmatprep.subr.bf16.mxu0 0
        %1752 = vmatpush1.bf16.msra.mxu0 %v1159
        %1753 = vmatprep.subr.bf16.mxu0 0
        %1754 = vmatpush1.bf16.msra.mxu0 %v1160
        %1755 = vmatprep.subr.bf16.mxu0 0
        %1756 = vmatpush1.bf16.msra.mxu0 %v1161
        %1757 = vmatprep.mubr.bf16.mxu0 %v602
        %1758 = vmatmul.mubr.bf16.gmra.mrb[0].mxu0 %v554
        %v1759 = vpop.f32.mrb[0].mxu0
        %v1760 = vadd.f32 %v1599, %v1759
        %v1761 = vpop.f32.mrb[0].mxu0
        %v1762 = vpop.f32.mrb[0].mxu0
        %v1763 = vadd.f32 %v1602, %v1762
        %v1764 = vpop.f32.mrb[0].mxu0
        %1765 = vmatprep.mubr.bf16.mxu0 %v603
        %1766 = vmatmul.mubr.bf16.gmra.mrb[0].mxu0 %v555
        %v1767 = vpop.f32.mrb[0].mxu0
        %v1768 = vadd.f32 %v1607, %v1767
        %v1769 = vpop.f32.mrb[0].mxu0
        %v1770 = vpop.f32.mrb[0].mxu0
        %v1771 = vadd.f32 %v1610, %v1770
        %v1772 = vpop.f32.mrb[0].mxu0
        %1773 = vmatprep.mubr.bf16.mxu0 %v604
        %1774 = vmatmul.mubr.bf16.gmra.mrb[0].mxu0 %v556
        %v1775 = vpop.f32.mrb[0].mxu0
        %v1776 = vadd.f32 %v1615, %v1775
        %v1777 = vpop.f32.mrb[0].mxu0
        %v1778 = vpop.f32.mrb[0].mxu0
        %v1779 = vadd.f32 %v1618, %v1778
        %v1780 = vpop.f32.mrb[0].mxu0
        %1781 = vmatprep.mubr.bf16.mxu0 %v605
        %1782 = vmatmul.mubr.bf16.gmra.mrb[0].mxu0 %v557
        %v1783 = vpop.f32.mrb[0].mxu0
        %v1784 = vadd.f32 %v1623, %v1783
        %v1785 = vpop.f32.mrb[0].mxu0
        %v1786 = vpop.f32.mrb[0].mxu0
        %v1787 = vadd.f32 %v1626, %v1786
        %v1788 = vpop.f32.mrb[0].mxu0
        %1789 = vmatprep.mubr.bf16.mxu0 %v606
        %1790 = vmatmul.mubr.bf16.gmra.mrb[0].mxu0 %v558
        %v1791 = vpop.f32.mrb[0].mxu0
        %v1792 = vadd.f32 %v1631, %v1791
        %v1793 = vpop.f32.mrb[0].mxu0
        %v1794 = vpop.f32.mrb[0].mxu0
        %v1795 = vadd.f32 %v1634, %v1794
        %v1796 = vpop.f32.mrb[0].mxu0
        %1797 = vmatprep.mubr.bf16.mxu0 %v607
        %1798 = vmatmul.mubr.bf16.gmra.mrb[0].mxu0 %v559
        %v1799 = vpop.f32.mrb[0].mxu0
        %v1800 = vadd.f32 %v1639, %v1799
        %v1801 = vpop.f32.mrb[0].mxu0
        %v1802 = vpop.f32.mrb[0].mxu0
        %v1803 = vadd.f32 %v1642, %v1802
        %v1804 = vpop.f32.mrb[0].mxu0
        %1805 = vmatprep.mubr.bf16.mxu0 %v608
        %1806 = vmatmul.mubr.bf16.gmra.mrb[0].mxu0 %v560
        %v1807 = vpop.f32.mrb[0].mxu0
        %v1808 = vadd.f32 %v1647, %v1807
        %v1809 = vpop.f32.mrb[0].mxu0
        %v1810 = vpop.f32.mrb[0].mxu0
        %v1811 = vadd.f32 %v1650, %v1810
        %v1812 = vpop.f32.mrb[0].mxu0
        %1813 = vmatprep.mubr.bf16.mxu0 %v609
        %1814 = vmatmul.mubr.bf16.gmra.mrb[0].mxu0 %v561
        %v1815 = vpop.f32.mrb[0].mxu0
        %v1816 = vadd.f32 %v1655, %v1815
        %v1817 = vpop.f32.mrb[0].mxu0
        %v1818 = vpop.f32.mrb[0].mxu0
        %v1819 = vadd.f32 %v1658, %v1818
        %v1820 = vpop.f32.mrb[0].mxu0
        %1821 = vmatprep.mubr.bf16.mxu0 %v610
        %1822 = vmatmul.mubr.bf16.gmra.mrb[0].mxu0 %v562
        %v1823 = vpop.f32.mrb[0].mxu0
        %v1824 = vadd.f32 %v1663, %v1823
        %v1825 = vpop.f32.mrb[0].mxu0
        %v1826 = vpop.f32.mrb[0].mxu0
        %v1827 = vadd.f32 %v1666, %v1826
        %v1828 = vpop.f32.mrb[0].mxu0
        %1829 = vmatprep.mubr.bf16.mxu0 %v611
        %1830 = vmatmul.mubr.bf16.gmra.mrb[0].mxu0 %v563
        %v1831 = vpop.f32.mrb[0].mxu0
        %v1832 = vadd.f32 %v1671, %v1831
        %v1833 = vpop.f32.mrb[0].mxu0
        %v1834 = vpop.f32.mrb[0].mxu0
        %v1835 = vadd.f32 %v1674, %v1834
        %v1836 = vpop.f32.mrb[0].mxu0
        %1837 = vmatprep.mubr.bf16.mxu0 %v612
        %1838 = vmatmul.mubr.bf16.gmra.mrb[0].mxu0 %v564
        %v1839 = vpop.f32.mrb[0].mxu0
        %v1840 = vadd.f32 %v1679, %v1839
        %v1841 = vpop.f32.mrb[0].mxu0
        %v1842 = vpop.f32.mrb[0].mxu0
        %v1843 = vadd.f32 %v1682, %v1842
        %v1844 = vpop.f32.mrb[0].mxu0
        %1845 = vmatprep.mubr.bf16.mxu0 %v613
        %1846 = vmatmul.mubr.bf16.gmra.mrb[0].mxu0 %v565
        %v1847 = vpop.f32.mrb[0].mxu0
        %v1848 = vadd.f32 %v1687, %v1847
        %v1849 = vpop.f32.mrb[0].mxu0
        %v1850 = vpop.f32.mrb[0].mxu0
        %v1851 = vadd.f32 %v1690, %v1850
        %v1852 = vpop.f32.mrb[0].mxu0
        %1853 = vmatprep.mubr.bf16.mxu0 %v614
        %1854 = vmatmul.mubr.bf16.gmra.mrb[0].mxu0 %v566
        %v1855 = vpop.f32.mrb[0].mxu0
        %v1856 = vadd.f32 %v1695, %v1855
        %v1857 = vpop.f32.mrb[0].mxu0
        %v1858 = vpop.f32.mrb[0].mxu0
        %v1859 = vadd.f32 %v1698, %v1858
        %v1860 = vpop.f32.mrb[0].mxu0
        %1861 = vmatprep.mubr.bf16.mxu0 %v615
        %1862 = vmatmul.mubr.bf16.gmra.mrb[0].mxu0 %v567
        %v1863 = vpop.f32.mrb[0].mxu0
        %v1864 = vadd.f32 %v1703, %v1863
        %v1865 = vpop.f32.mrb[0].mxu0
        %v1866 = vpop.f32.mrb[0].mxu0
        %v1867 = vadd.f32 %v1706, %v1866
        %v1868 = vpop.f32.mrb[0].mxu0
        %1869 = vmatprep.mubr.bf16.mxu0 %v616
        %1870 = vmatmul.mubr.bf16.gmra.mrb[0].mxu0 %v568
        %v1871 = vpop.f32.mrb[0].mxu0
        %v1872 = vadd.f32 %v1711, %v1871
        %v1873 = vpop.f32.mrb[0].mxu0
        %v1874 = vpop.f32.mrb[0].mxu0
        %v1875 = vadd.f32 %v1714, %v1874
        %v1876 = vpop.f32.mrb[0].mxu0
        %1877 = vmatprep.mubr.bf16.mxu0 %v617
        %1878 = vmatmul.mubr.bf16.gmra.mrb[0].mxu0 %v569
        %v1879 = vpop.f32.mrb[0].mxu0
        %v1880 = vadd.f32 %v1719, %v1879
        %v1881 = vpop.f32.mrb[0].mxu0
        %v1882 = vpop.f32.mrb[0].mxu0
        %v1883 = vadd.f32 %v1722, %v1882
        %v1884 = vpop.f32.mrb[0].mxu0
        %1885 = vdwg.mxu0
        %1886 = vmatprep.subr.bf16.mxu0 0
        %1887 = vmatpush1.bf16.msra.mxu0 %v1162
        %1888 = vmatprep.subr.bf16.mxu0 0
        %1889 = vmatpush1.bf16.msra.mxu0 %v1163
        %1890 = vmatprep.subr.bf16.mxu0 0
        %1891 = vmatpush1.bf16.msra.mxu0 %v1164
        %1892 = vmatprep.subr.bf16.mxu0 0
        %1893 = vmatpush1.bf16.msra.mxu0 %v1165
        %1894 = vmatprep.subr.bf16.mxu0 0
        %1895 = vmatpush1.bf16.msra.mxu0 %v1166
        %1896 = vmatprep.subr.bf16.mxu0 0
        %1897 = vmatpush1.bf16.msra.mxu0 %v1167
        %1898 = vmatprep.subr.bf16.mxu0 0
        %1899 = vmatpush1.bf16.msra.mxu0 %v1168
        %1900 = vmatprep.subr.bf16.mxu0 0
        %1901 = vmatpush1.bf16.msra.mxu0 %v1169
        %1902 = vmatprep.subr.bf16.mxu0 0
        %1903 = vmatpush1.bf16.msra.mxu0 0
        %1904 = vmatprep.subr.bf16.mxu0 0
        %1905 = vmatpush1.bf16.msra.mxu0 0
        %1906 = vmatprep.subr.bf16.mxu0 0
        %1907 = vmatpush1.bf16.msra.mxu0 0
        %1908 = vmatprep.subr.bf16.mxu0 0
        %1909 = vmatpush1.bf16.msra.mxu0 0
        %1910 = vmatprep.subr.bf16.mxu0 0
        %1911 = vmatpush1.bf16.msra.mxu0 0
        %1912 = vmatprep.subr.bf16.mxu0 0
        %1913 = vmatpush1.bf16.msra.mxu0 0
        %1914 = vmatprep.subr.bf16.mxu0 0
        %1915 = vmatpush1.bf16.msra.mxu0 0
        %1916 = vmatprep.subr.bf16.mxu0 0
        %1917 = vmatpush1.bf16.msra.mxu0 0
        %1918 = vmatprep.mubr.bf16.mxu0 0
        %1919 = vmatmul.mubr.bf16.gmra.mrb[0].mxu0 %v650
        %v1920 = vpop.f32.mrb[0].mxu0
        %v1921 = vadd.f32 %v1760, %v1920
        %v1922 = vpop.f32.mrb[0].mxu0
        %v1923 = vpop.f32.mrb[0].mxu0
        %v1924 = vadd.f32 %v1763, %v1923
        %v1925 = vpop.f32.mrb[0].mxu0
        %1926 = vmatprep.mubr.bf16.mxu0 0
        %1927 = vmatmul.mubr.bf16.gmra.mrb[0].mxu0 %v651
        %v1928 = vpop.f32.mrb[0].mxu0
        %v1929 = vadd.f32 %v1768, %v1928
        %v1930 = vpop.f32.mrb[0].mxu0
        %v1931 = vpop.f32.mrb[0].mxu0
        %v1932 = vadd.f32 %v1771, %v1931
        %v1933 = vpop.f32.mrb[0].mxu0
        %1934 = vmatprep.mubr.bf16.mxu0 0
        %1935 = vmatmul.mubr.bf16.gmra.mrb[0].mxu0 %v652
        %v1936 = vpop.f32.mrb[0].mxu0
        %v1937 = vadd.f32 %v1776, %v1936
        %v1938 = vpop.f32.mrb[0].mxu0
        %v1939 = vpop.f32.mrb[0].mxu0
        %v1940 = vadd.f32 %v1779, %v1939
        %v1941 = vpop.f32.mrb[0].mxu0
        %1942 = vmatprep.mubr.bf16.mxu0 0
        %1943 = vmatmul.mubr.bf16.gmra.mrb[0].mxu0 %v653
        %v1944 = vpop.f32.mrb[0].mxu0
        %v1945 = vadd.f32 %v1784, %v1944
        %v1946 = vpop.f32.mrb[0].mxu0
        %v1947 = vpop.f32.mrb[0].mxu0
        %v1948 = vadd.f32 %v1787, %v1947
        %v1949 = vpop.f32.mrb[0].mxu0
        %1950 = vmatprep.mubr.bf16.mxu0 0
        %1951 = vmatmul.mubr.bf16.gmra.mrb[0].mxu0 %v654
        %v1952 = vpop.f32.mrb[0].mxu0
        %v1953 = vadd.f32 %v1792, %v1952
        %v1954 = vpop.f32.mrb[0].mxu0
        %v1955 = vpop.f32.mrb[0].mxu0
        %v1956 = vadd.f32 %v1795, %v1955
        %v1957 = vpop.f32.mrb[0].mxu0
        %1958 = vmatprep.mubr.bf16.mxu0 0
        %1959 = vmatmul.mubr.bf16.gmra.mrb[0].mxu0 %v655
        %v1960 = vpop.f32.mrb[0].mxu0
        %v1961 = vadd.f32 %v1800, %v1960
        %v1962 = vpop.f32.mrb[0].mxu0
        %v1963 = vpop.f32.mrb[0].mxu0
        %v1964 = vadd.f32 %v1803, %v1963
        %v1965 = vpop.f32.mrb[0].mxu0
        %1966 = vmatprep.mubr.bf16.mxu0 0
        %1967 = vmatmul.mubr.bf16.gmra.mrb[0].mxu0 %v656
        %v1968 = vpop.f32.mrb[0].mxu0
        %v1969 = vadd.f32 %v1808, %v1968
        %v1970 = vpop.f32.mrb[0].mxu0
        %v1971 = vpop.f32.mrb[0].mxu0
        %v1972 = vadd.f32 %v1811, %v1971
        %v1973 = vpop.f32.mrb[0].mxu0
        %1974 = vmatprep.mubr.bf16.mxu0 0
        %1975 = vmatmul.mubr.bf16.gmra.mrb[0].mxu0 %v657
        %v1976 = vpop.f32.mrb[0].mxu0
        %v1977 = vadd.f32 %v1816, %v1976
        %v1978 = vpop.f32.mrb[0].mxu0
        %v1979 = vpop.f32.mrb[0].mxu0
        %v1980 = vadd.f32 %v1819, %v1979
        %v1981 = vpop.f32.mrb[0].mxu0
        %1982 = vmatprep.mubr.bf16.mxu0 0
        %1983 = vmatmul.mubr.bf16.gmra.mrb[0].mxu0 %v658
        %v1984 = vpop.f32.mrb[0].mxu0
        %v1985 = vadd.f32 %v1824, %v1984
        %v1986 = vpop.f32.mrb[0].mxu0
        %v1987 = vpop.f32.mrb[0].mxu0
        %v1988 = vadd.f32 %v1827, %v1987
        %v1989 = vpop.f32.mrb[0].mxu0
        %1990 = vmatprep.mubr.bf16.mxu0 0
        %1991 = vmatmul.mubr.bf16.gmra.mrb[0].mxu0 %v659
        %v1992 = vpop.f32.mrb[0].mxu0
        %v1993 = vadd.f32 %v1832, %v1992
        %v1994 = vpop.f32.mrb[0].mxu0
        %v1995 = vpop.f32.mrb[0].mxu0
        %v1996 = vadd.f32 %v1835, %v1995
        %v1997 = vpop.f32.mrb[0].mxu0
        %1998 = vmatprep.mubr.bf16.mxu0 0
        %1999 = vmatmul.mubr.bf16.gmra.mrb[0].mxu0 %v660
        %v2000 = vpop.f32.mrb[0].mxu0
        %v2001 = vadd.f32 %v1840, %v2000
        %v2002 = vpop.f32.mrb[0].mxu0
        %v2003 = vpop.f32.mrb[0].mxu0
        %v2004 = vadd.f32 %v1843, %v2003
        %v2005 = vpop.f32.mrb[0].mxu0
        %2006 = vmatprep.mubr.bf16.mxu0 0
        %2007 = vmatmul.mubr.bf16.gmra.mrb[0].mxu0 %v661
        %v2008 = vpop.f32.mrb[0].mxu0
        %v2009 = vadd.f32 %v1848, %v2008
        %v2010 = vpop.f32.mrb[0].mxu0
        %v2011 = vpop.f32.mrb[0].mxu0
        %v2012 = vadd.f32 %v1851, %v2011
        %v2013 = vpop.f32.mrb[0].mxu0
        %2014 = vmatprep.mubr.bf16.mxu0 0
        %2015 = vmatmul.mubr.bf16.gmra.mrb[0].mxu0 %v662
        %v2016 = vpop.f32.mrb[0].mxu0
        %v2017 = vadd.f32 %v1856, %v2016
        %v2018 = vpop.f32.mrb[0].mxu0
        %v2019 = vpop.f32.mrb[0].mxu0
        %v2020 = vadd.f32 %v1859, %v2019
        %v2021 = vpop.f32.mrb[0].mxu0
        %2022 = vmatprep.mubr.bf16.mxu0 0
        %2023 = vmatmul.mubr.bf16.gmra.mrb[0].mxu0 %v663
        %v2024 = vpop.f32.mrb[0].mxu0
        %v2025 = vadd.f32 %v1864, %v2024
        %v2026 = vpop.f32.mrb[0].mxu0
        %v2027 = vpop.f32.mrb[0].mxu0
        %v2028 = vadd.f32 %v1867, %v2027
        %v2029 = vpop.f32.mrb[0].mxu0
        %2030 = vmatprep.mubr.bf16.mxu0 0
        %2031 = vmatmul.mubr.bf16.gmra.mrb[0].mxu0 %v664
        %v2032 = vpop.f32.mrb[0].mxu0
        %v2033 = vadd.f32 %v1872, %v2032
        %v2034 = vpop.f32.mrb[0].mxu0
        %v2035 = vpop.f32.mrb[0].mxu0
        %v2036 = vadd.f32 %v1875, %v2035
        %v2037 = vpop.f32.mrb[0].mxu0
        %2038 = vmatprep.mubr.bf16.mxu0 0
        %2039 = vmatmul.mubr.bf16.gmra.mrb[0].mxu0 %v665
        %v2040 = vpop.f32.mrb[0].mxu0
        %v2041 = vadd.f32 %v1880, %v2040
        %v2042 = vpop.f32.mrb[0].mxu0
        %v2043 = vpop.f32.mrb[0].mxu0
        %v2044 = vadd.f32 %v1883, %v2043
        %v2045 = vpop.f32.mrb[0].mxu0
        %2046 = vdwg.mxu0
        %v2047 = vlaneseq
        %v2048 = vshrl.u32 %v2047, 7
        %v2049 = vsub.s32 0, %v2048
        %v2050 = vrot.slane %v231, %v2049
        %v2051 = vmul.f32 %v1921, %v2050
        %v2052 = vmul.f32 %v1924, %v2050
        %v2053 = vmul.f32 %v1929, %v2050
        %v2054 = vmul.f32 %v1932, %v2050
        %v2055 = vmul.f32 %v1937, %v2050
        %v2056 = vmul.f32 %v1940, %v2050
        %v2057 = vmul.f32 %v1945, %v2050
        %v2058 = vmul.f32 %v1948, %v2050
        %v2059 = vmul.f32 %v1953, %v2050
        %v2060 = vmul.f32 %v1956, %v2050
        %v2061 = vmul.f32 %v1961, %v2050
        %v2062 = vmul.f32 %v1964, %v2050
        %v2063 = vmul.f32 %v1969, %v2050
        %v2064 = vmul.f32 %v1972, %v2050
        %v2065 = vmul.f32 %v1977, %v2050
        %v2066 = vmul.f32 %v1980, %v2050
        %v2067 = vmul.f32 %v1985, %v2050
        %v2068 = vmul.f32 %v1988, %v2050
        %v2069 = vmul.f32 %v1993, %v2050
        %v2070 = vmul.f32 %v1996, %v2050
        %v2071 = vmul.f32 %v2001, %v2050
        %v2072 = vmul.f32 %v2004, %v2050
        %v2073 = vmul.f32 %v2009, %v2050
        %v2074 = vmul.f32 %v2012, %v2050
        %v2075 = vmul.f32 %v2017, %v2050
        %v2076 = vmul.f32 %v2020, %v2050
        %v2077 = vmul.f32 %v2025, %v2050
        %v2078 = vmul.f32 %v2028, %v2050
        %v2079 = vmul.f32 %v2033, %v2050
        %v2080 = vmul.f32 %v2036, %v2050
        %v2081 = vmul.f32 %v2041, %v2050
        %v2082 = vmul.f32 %v2044, %v2050
        %v2083 = vadd.f32 %v425, %v2051
        %v2084 = vadd.f32 %v426, %v2052
        %v2085 = vadd.f32 %v427, %v2053
        %v2086 = vadd.f32 %v428, %v2054
        %v2087 = vadd.f32 %v429, %v2055
        %v2088 = vadd.f32 %v430, %v2056
        %v2089 = vadd.f32 %v431, %v2057
        %v2090 = vadd.f32 %v432, %v2058
        %v2091 = vadd.f32 %v433, %v2059
        %v2092 = vadd.f32 %v434, %v2060
        %v2093 = vadd.f32 %v435, %v2061
        %v2094 = vadd.f32 %v436, %v2062
        %v2095 = vadd.f32 %v437, %v2063
        %v2096 = vadd.f32 %v438, %v2064
        %v2097 = vadd.f32 %v439, %v2065
        %v2098 = vadd.f32 %v440, %v2066
        %v2099 = vadd.f32 %v441, %v2067
        %v2100 = vadd.f32 %v442, %v2068
        %v2101 = vadd.f32 %v443, %v2069
        %v2102 = vadd.f32 %v444, %v2070
        %v2103 = vadd.f32 %v445, %v2071
        %v2104 = vadd.f32 %v446, %v2072
        %v2105 = vadd.f32 %v447, %v2073
        %v2106 = vadd.f32 %v448, %v2074
        %v2107 = vadd.f32 %v449, %v2075
        %v2108 = vadd.f32 %v450, %v2076
        %v2109 = vadd.f32 %v451, %v2077
        %v2110 = vadd.f32 %v452, %v2078
        %v2111 = vadd.f32 %v453, %v2079
        %v2112 = vadd.f32 %v454, %v2080
        %v2113 = vadd.f32 %v455, %v2081
        %v2114 = vadd.f32 %v456, %v2082
        %v2115 = vlaneseq
        %v2116 = vshrl.u32 %v2115, 7
        %v2117 = vsub.s32 1, %v2116
        %v2118 = vrot.slane %v231, %v2117
        %v2119 = vadd.f32 %v2083, %v2118
        %v2120 = vadd.f32 %v2084, %v2118
        %v2121 = vadd.f32 %v2085, %v2118
        %v2122 = vadd.f32 %v2086, %v2118
        %v2123 = vadd.f32 %v2087, %v2118
        %v2124 = vadd.f32 %v2088, %v2118
        %v2125 = vadd.f32 %v2089, %v2118
        %v2126 = vadd.f32 %v2090, %v2118
        %v2127 = vadd.f32 %v2091, %v2118
        %v2128 = vadd.f32 %v2092, %v2118
        %v2129 = vadd.f32 %v2093, %v2118
        %v2130 = vadd.f32 %v2094, %v2118
        %v2131 = vadd.f32 %v2095, %v2118
        %v2132 = vadd.f32 %v2096, %v2118
        %v2133 = vadd.f32 %v2097, %v2118
        %v2134 = vadd.f32 %v2098, %v2118
        %v2135 = vadd.f32 %v2099, %v2118
        %v2136 = vadd.f32 %v2100, %v2118
        %v2137 = vadd.f32 %v2101, %v2118
        %v2138 = vadd.f32 %v2102, %v2118
        %v2139 = vadd.f32 %v2103, %v2118
        %v2140 = vadd.f32 %v2104, %v2118
        %v2141 = vadd.f32 %v2105, %v2118
        %v2142 = vadd.f32 %v2106, %v2118
        %v2143 = vadd.f32 %v2107, %v2118
        %v2144 = vadd.f32 %v2108, %v2118
        %v2145 = vadd.f32 %v2109, %v2118
        %v2146 = vadd.f32 %v2110, %v2118
        %v2147 = vadd.f32 %v2111, %v2118
        %v2148 = vadd.f32 %v2112, %v2118
        %v2149 = vadd.f32 %v2113, %v2118
        %v2150 = vadd.f32 %v2114, %v2118
        %vm2151 = vcmp.ge.f32.partialorder %v2119, 0.0
        %vm2152 = vcmp.ge.f32.partialorder %v2120, 0.0
        %vm2153 = vcmp.ge.f32.partialorder %v2121, 0.0
        %vm2154 = vcmp.ge.f32.partialorder %v2122, 0.0
        %vm2155 = vcmp.ge.f32.partialorder %v2123, 0.0
        %vm2156 = vcmp.ge.f32.partialorder %v2124, 0.0
        %vm2157 = vcmp.ge.f32.partialorder %v2125, 0.0
        %vm2158 = vcmp.ge.f32.partialorder %v2126, 0.0
        %vm2159 = vcmp.ge.f32.partialorder %v2127, 0.0
        %vm2160 = vcmp.ge.f32.partialorder %v2128, 0.0
        %vm2161 = vcmp.ge.f32.partialorder %v2129, 0.0
        %vm2162 = vcmp.ge.f32.partialorder %v2130, 0.0
        %vm2163 = vcmp.ge.f32.partialorder %v2131, 0.0
        %vm2164 = vcmp.ge.f32.partialorder %v2132, 0.0
        %vm2165 = vcmp.ge.f32.partialorder %v2133, 0.0
        %vm2166 = vcmp.ge.f32.partialorder %v2134, 0.0
        %vm2167 = vcmp.ge.f32.partialorder %v2135, 0.0
        %vm2168 = vcmp.ge.f32.partialorder %v2136, 0.0
        %vm2169 = vcmp.ge.f32.partialorder %v2137, 0.0
        %vm2170 = vcmp.ge.f32.partialorder %v2138, 0.0
        %vm2171 = vcmp.ge.f32.partialorder %v2139, 0.0
        %vm2172 = vcmp.ge.f32.partialorder %v2140, 0.0
        %vm2173 = vcmp.ge.f32.partialorder %v2141, 0.0
        %vm2174 = vcmp.ge.f32.partialorder %v2142, 0.0
        %vm2175 = vcmp.ge.f32.partialorder %v2143, 0.0
        %vm2176 = vcmp.ge.f32.partialorder %v2144, 0.0
        %vm2177 = vcmp.ge.f32.partialorder %v2145, 0.0
        %vm2178 = vcmp.ge.f32.partialorder %v2146, 0.0
        %vm2179 = vcmp.ge.f32.partialorder %v2147, 0.0
        %vm2180 = vcmp.ge.f32.partialorder %v2148, 0.0
        %vm2181 = vcmp.ge.f32.partialorder %v2149, 0.0
        %vm2182 = vcmp.ge.f32.partialorder %v2150, 0.0
        %v2183 = vlaneseq
        %v2184 = vshrl.u32 %v2183, 7
        %v2185 = vsub.s32 2, %v2184
        %v2186 = vrot.slane %v231, %v2185
        %v2187 = vmul.f32 %v2186, %v2119
        %v2188 = vmul.f32 %v2186, %v2120
        %v2189 = vmul.f32 %v2186, %v2121
        %v2190 = vmul.f32 %v2186, %v2122
        %v2191 = vmul.f32 %v2186, %v2123
        %v2192 = vmul.f32 %v2186, %v2124
        %v2193 = vmul.f32 %v2186, %v2125
        %v2194 = vmul.f32 %v2186, %v2126
        %v2195 = vmul.f32 %v2186, %v2127
        %v2196 = vmul.f32 %v2186, %v2128
        %v2197 = vmul.f32 %v2186, %v2129
        %v2198 = vmul.f32 %v2186, %v2130
        %v2199 = vmul.f32 %v2186, %v2131
        %v2200 = vmul.f32 %v2186, %v2132
        %v2201 = vmul.f32 %v2186, %v2133
        %v2202 = vmul.f32 %v2186, %v2134
        %v2203 = vmul.f32 %v2186, %v2135
        %v2204 = vmul.f32 %v2186, %v2136
        %v2205 = vmul.f32 %v2186, %v2137
        %v2206 = vmul.f32 %v2186, %v2138
        %v2207 = vmul.f32 %v2186, %v2139
        %v2208 = vmul.f32 %v2186, %v2140
        %v2209 = vmul.f32 %v2186, %v2141
        %v2210 = vmul.f32 %v2186, %v2142
        %v2211 = vmul.f32 %v2186, %v2143
        %v2212 = vmul.f32 %v2186, %v2144
        %v2213 = vmul.f32 %v2186, %v2145
        %v2214 = vmul.f32 %v2186, %v2146
        %v2215 = vmul.f32 %v2186, %v2147
        %v2216 = vmul.f32 %v2186, %v2148
        %v2217 = vmul.f32 %v2186, %v2149
        %v2218 = vmul.f32 %v2186, %v2150
        %v2219 = vsel %vm2151, %v2119, %v2187
        %v2220 = vsel %vm2152, %v2120, %v2188
        %v2221 = vsel %vm2153, %v2121, %v2189
        %v2222 = vsel %vm2154, %v2122, %v2190
        %v2223 = vsel %vm2155, %v2123, %v2191
        %v2224 = vsel %vm2156, %v2124, %v2192
        %v2225 = vsel %vm2157, %v2125, %v2193
        %v2226 = vsel %vm2158, %v2126, %v2194
        %v2227 = vsel %vm2159, %v2127, %v2195
        %v2228 = vsel %vm2160, %v2128, %v2196
        %v2229 = vsel %vm2161, %v2129, %v2197
        %v2230 = vsel %vm2162, %v2130, %v2198
        %v2231 = vsel %vm2163, %v2131, %v2199
        %v2232 = vsel %vm2164, %v2132, %v2200
        %v2233 = vsel %vm2165, %v2133, %v2201
        %v2234 = vsel %vm2166, %v2134, %v2202
        %v2235 = vsel %vm2167, %v2135, %v2203
        %v2236 = vsel %vm2168, %v2136, %v2204
        %v2237 = vsel %vm2169, %v2137, %v2205
        %v2238 = vsel %vm2170, %v2138, %v2206
        %v2239 = vsel %vm2171, %v2139, %v2207
        %v2240 = vsel %vm2172, %v2140, %v2208
        %v2241 = vsel %vm2173, %v2141, %v2209
        %v2242 = vsel %vm2174, %v2142, %v2210
        %v2243 = vsel %vm2175, %v2143, %v2211
        %v2244 = vsel %vm2176, %v2144, %v2212
        %v2245 = vsel %vm2177, %v2145, %v2213
        %v2246 = vsel %vm2178, %v2146, %v2214
        %v2247 = vsel %vm2179, %v2147, %v2215
        %v2248 = vsel %vm2180, %v2148, %v2216
        %v2249 = vsel %vm2181, %v2149, %v2217
        %v2250 = vsel %vm2182, %v2150, %v2218
        %v2251 = vpack.c.bf16 %v2220, %v2219
        %v2252 = vpack.c.bf16 %v2222, %v2221
        %v2253 = vpack.c.bf16 %v2224, %v2223
        %v2254 = vpack.c.bf16 %v2226, %v2225
        %v2255 = vpack.c.bf16 %v2228, %v2227
        %v2256 = vpack.c.bf16 %v2230, %v2229
        %v2257 = vpack.c.bf16 %v2232, %v2231
        %v2258 = vpack.c.bf16 %v2234, %v2233
        %v2259 = vpack.c.bf16 %v2236, %v2235
        %v2260 = vpack.c.bf16 %v2238, %v2237
        %v2261 = vpack.c.bf16 %v2240, %v2239
        %v2262 = vpack.c.bf16 %v2242, %v2241
        %v2263 = vpack.c.bf16 %v2244, %v2243
        %v2264 = vpack.c.bf16 %v2246, %v2245
        %v2265 = vpack.c.bf16 %v2248, %v2247
        %v2266 = vpack.c.bf16 %v2250, %v2249
        %v2267 = vld [vmem:[%s2] sm:$0xf]
        %v2268 = vld [vmem:[%s2 + $0x4] sm:$0xf]
        %v2269 = vld [vmem:[%s2 + $0x8] sm:$0xf]
        %v2270 = vld [vmem:[%s2 + $0xc] sm:$0xf]
        %v2271 = vld [vmem:[%s2 + $0x10] sm:$0xf]
        %v2272 = vld [vmem:[%s2 + $0x14] sm:$0xf]
        %v2273 = vld [vmem:[%s2 + $0x18] sm:$0xf]
        %v2274 = vld [vmem:[%s2 + $0x1c] sm:$0xf]
        %v2275 = vld [vmem:[%s2 + $0x20] sm:$0xf]
        %v2276 = vld [vmem:[%s2 + $0x24] sm:$0xf]
        %v2277 = vld [vmem:[%s2 + $0x28] sm:$0xf]
        %v2278 = vld [vmem:[%s2 + $0x2c] sm:$0xf]
        %v2279 = vld [vmem:[%s2 + $0x30] sm:$0xf]
        %v2280 = vld [vmem:[%s2 + $0x34] sm:$0xf]
        %v2281 = vld [vmem:[%s2 + $0x38] sm:$0xf]
        %v2282 = vld [vmem:[%s2 + $0x3c] sm:$0xf]
        %v2299 = vunpack.c.l.b16 %v2267
        %v2300 = vunpack.c.l.b16 %v2268
        %v2301 = vunpack.c.l.b16 %v2269
        %v2302 = vunpack.c.l.b16 %v2270
        %v2303 = vunpack.c.l.b16 %v2271
        %v2304 = vunpack.c.l.b16 %v2272
        %v2305 = vunpack.c.l.b16 %v2273
        %v2306 = vunpack.c.l.b16 %v2274
        %v2307 = vunpack.c.l.b16 %v2275
        %v2308 = vunpack.c.l.b16 %v2276
        %v2309 = vunpack.c.l.b16 %v2277
        %v2310 = vunpack.c.l.b16 %v2278
        %v2311 = vunpack.c.l.b16 %v2279
        %v2312 = vunpack.c.l.b16 %v2280
        %v2313 = vunpack.c.l.b16 %v2281
        %v2314 = vunpack.c.l.b16 %v2282
        %v2315 = vpack.c.b16 %v2300, %v2299
        %v2316 = vpack.c.b16 %v2302, %v2301
        %v2317 = vpack.c.b16 %v2304, %v2303
        %v2318 = vpack.c.b16 %v2306, %v2305
        %v2319 = vpack.c.b16 %v2308, %v2307
        %v2320 = vpack.c.b16 %v2310, %v2309
        %v2321 = vpack.c.b16 %v2312, %v2311
        %v2322 = vpack.c.b16 %v2314, %v2313
        %2331 = vmatprep.subr.bf16.mxu0 0
        %2332 = vmatpush1.bf16.msra.mxu0 %v2315
        %2333 = vmatprep.subr.bf16.mxu0 0
        %2334 = vmatpush1.bf16.msra.mxu0 %v2316
        %2335 = vmatprep.subr.bf16.mxu0 0
        %2336 = vmatpush1.bf16.msra.mxu0 %v2317
        %2337 = vmatprep.subr.bf16.mxu0 0
        %2338 = vmatpush1.bf16.msra.mxu0 %v2318
        %2339 = vmatprep.subr.bf16.mxu0 0
        %2340 = vmatpush1.bf16.msra.mxu0 %v2319
        %2341 = vmatprep.subr.bf16.mxu0 0
        %2342 = vmatpush1.bf16.msra.mxu0 %v2320
        %2343 = vmatprep.subr.bf16.mxu0 0
        %2344 = vmatpush1.bf16.msra.mxu0 %v2321
        %2345 = vmatprep.subr.bf16.mxu0 0
        %2346 = vmatpush1.bf16.msra.mxu0 %v2322
        %2347 = vmatprep.subr.bf16.mxu0 0
        %2348 = vmatpush1.bf16.msra.mxu0 0
        %2349 = vmatprep.subr.bf16.mxu0 0
        %2350 = vmatpush1.bf16.msra.mxu0 0
        %2351 = vmatprep.subr.bf16.mxu0 0
        %2352 = vmatpush1.bf16.msra.mxu0 0
        %2353 = vmatprep.subr.bf16.mxu0 0
        %2354 = vmatpush1.bf16.msra.mxu0 0
        %2355 = vmatprep.subr.bf16.mxu0 0
        %2356 = vmatpush1.bf16.msra.mxu0 0
        %2357 = vmatprep.subr.bf16.mxu0 0
        %2358 = vmatpush1.bf16.msra.mxu0 0
        %2359 = vmatprep.subr.bf16.mxu0 0
        %2360 = vmatpush1.bf16.msra.mxu0 0
        %2361 = vmatprep.subr.bf16.mxu0 0
        %2362 = vmatpush1.bf16.msra.mxu0 0
        %2363 = vmatprep.mubr.bf16.mxu0 0
        %2364 = vmatmul.mubr.bf16.gmra.mrb[0].mxu0 %v2251
        %v2365 = vpop.f32.mrb[0].mxu0
        %v2366 = vadd.f32 0.0, %v2365
        %v2367 = vpop.f32.mrb[0].mxu0
        %v2368 = vpop.f32.mrb[0].mxu0
        %v2369 = vadd.f32 0.0, %v2368
        %v2370 = vpop.f32.mrb[0].mxu0
        %2371 = vmatprep.mubr.bf16.mxu0 0
        %2372 = vmatmul.mubr.bf16.gmra.mrb[0].mxu0 %v2252
        %v2373 = vpop.f32.mrb[0].mxu0
        %v2374 = vadd.f32 0.0, %v2373
        %v2375 = vpop.f32.mrb[0].mxu0
        %v2376 = vpop.f32.mrb[0].mxu0
        %v2377 = vadd.f32 0.0, %v2376
        %v2378 = vpop.f32.mrb[0].mxu0
        %2379 = vmatprep.mubr.bf16.mxu0 0
        %2380 = vmatmul.mubr.bf16.gmra.mrb[0].mxu0 %v2253
        %v2381 = vpop.f32.mrb[0].mxu0
        %v2382 = vadd.f32 0.0, %v2381
        %v2383 = vpop.f32.mrb[0].mxu0
        %v2384 = vpop.f32.mrb[0].mxu0
        %v2385 = vadd.f32 0.0, %v2384
        %v2386 = vpop.f32.mrb[0].mxu0
        %2387 = vmatprep.mubr.bf16.mxu0 0
        %2388 = vmatmul.mubr.bf16.gmra.mrb[0].mxu0 %v2254
        %v2389 = vpop.f32.mrb[0].mxu0
        %v2390 = vadd.f32 0.0, %v2389
        %v2391 = vpop.f32.mrb[0].mxu0
        %v2392 = vpop.f32.mrb[0].mxu0
        %v2393 = vadd.f32 0.0, %v2392
        %v2394 = vpop.f32.mrb[0].mxu0
        %2395 = vmatprep.mubr.bf16.mxu0 0
        %2396 = vmatmul.mubr.bf16.gmra.mrb[0].mxu0 %v2255
        %v2397 = vpop.f32.mrb[0].mxu0
        %v2398 = vadd.f32 0.0, %v2397
        %v2399 = vpop.f32.mrb[0].mxu0
        %v2400 = vpop.f32.mrb[0].mxu0
        %v2401 = vadd.f32 0.0, %v2400
        %v2402 = vpop.f32.mrb[0].mxu0
        %2403 = vmatprep.mubr.bf16.mxu0 0
        %2404 = vmatmul.mubr.bf16.gmra.mrb[0].mxu0 %v2256
        %v2405 = vpop.f32.mrb[0].mxu0
        %v2406 = vadd.f32 0.0, %v2405
        %v2407 = vpop.f32.mrb[0].mxu0
        %v2408 = vpop.f32.mrb[0].mxu0
        %v2409 = vadd.f32 0.0, %v2408
        %v2410 = vpop.f32.mrb[0].mxu0
        %2411 = vmatprep.mubr.bf16.mxu0 0
        %2412 = vmatmul.mubr.bf16.gmra.mrb[0].mxu0 %v2257
        %v2413 = vpop.f32.mrb[0].mxu0
        %v2414 = vadd.f32 0.0, %v2413
        %v2415 = vpop.f32.mrb[0].mxu0
        %v2416 = vpop.f32.mrb[0].mxu0
        %v2417 = vadd.f32 0.0, %v2416
        %v2418 = vpop.f32.mrb[0].mxu0
        %2419 = vmatprep.mubr.bf16.mxu0 0
        %2420 = vmatmul.mubr.bf16.gmra.mrb[0].mxu0 %v2258
        %v2421 = vpop.f32.mrb[0].mxu0
        %v2422 = vadd.f32 0.0, %v2421
        %v2423 = vpop.f32.mrb[0].mxu0
        %v2424 = vpop.f32.mrb[0].mxu0
        %v2425 = vadd.f32 0.0, %v2424
        %v2426 = vpop.f32.mrb[0].mxu0
        %2427 = vmatprep.mubr.bf16.mxu0 0
        %2428 = vmatmul.mubr.bf16.gmra.mrb[0].mxu0 %v2259
        %v2429 = vpop.f32.mrb[0].mxu0
        %v2430 = vadd.f32 0.0, %v2429
        %v2431 = vpop.f32.mrb[0].mxu0
        %v2432 = vpop.f32.mrb[0].mxu0
        %v2433 = vadd.f32 0.0, %v2432
        %v2434 = vpop.f32.mrb[0].mxu0
        %2435 = vmatprep.mubr.bf16.mxu0 0
        %2436 = vmatmul.mubr.bf16.gmra.mrb[0].mxu0 %v2260
        %v2437 = vpop.f32.mrb[0].mxu0
        %v2438 = vadd.f32 0.0, %v2437
        %v2439 = vpop.f32.mrb[0].mxu0
        %v2440 = vpop.f32.mrb[0].mxu0
        %v2441 = vadd.f32 0.0, %v2440
        %v2442 = vpop.f32.mrb[0].mxu0
        %2443 = vmatprep.mubr.bf16.mxu0 0
        %2444 = vmatmul.mubr.bf16.gmra.mrb[0].mxu0 %v2261
        %v2445 = vpop.f32.mrb[0].mxu0
        %v2446 = vadd.f32 0.0, %v2445
        %v2447 = vpop.f32.mrb[0].mxu0
        %v2448 = vpop.f32.mrb[0].mxu0
        %v2449 = vadd.f32 0.0, %v2448
        %v2450 = vpop.f32.mrb[0].mxu0
        %2451 = vmatprep.mubr.bf16.mxu0 0
        %2452 = vmatmul.mubr.bf16.gmra.mrb[0].mxu0 %v2262
        %v2453 = vpop.f32.mrb[0].mxu0
        %v2454 = vadd.f32 0.0, %v2453
        %v2455 = vpop.f32.mrb[0].mxu0
        %v2456 = vpop.f32.mrb[0].mxu0
        %v2457 = vadd.f32 0.0, %v2456
        %v2458 = vpop.f32.mrb[0].mxu0
        %2459 = vmatprep.mubr.bf16.mxu0 0
        %2460 = vmatmul.mubr.bf16.gmra.mrb[0].mxu0 %v2263
        %v2461 = vpop.f32.mrb[0].mxu0
        %v2462 = vadd.f32 0.0, %v2461
        %v2463 = vpop.f32.mrb[0].mxu0
        %v2464 = vpop.f32.mrb[0].mxu0
        %v2465 = vadd.f32 0.0, %v2464
        %v2466 = vpop.f32.mrb[0].mxu0
        %2467 = vmatprep.mubr.bf16.mxu0 0
        %2468 = vmatmul.mubr.bf16.gmra.mrb[0].mxu0 %v2264
        %v2469 = vpop.f32.mrb[0].mxu0
        %v2470 = vadd.f32 0.0, %v2469
        %v2471 = vpop.f32.mrb[0].mxu0
        %v2472 = vpop.f32.mrb[0].mxu0
        %v2473 = vadd.f32 0.0, %v2472
        %v2474 = vpop.f32.mrb[0].mxu0
        %2475 = vmatprep.mubr.bf16.mxu0 0
        %2476 = vmatmul.mubr.bf16.gmra.mrb[0].mxu0 %v2265
        %v2477 = vpop.f32.mrb[0].mxu0
        %v2478 = vadd.f32 0.0, %v2477
        %v2479 = vpop.f32.mrb[0].mxu0
        %v2480 = vpop.f32.mrb[0].mxu0
        %v2481 = vadd.f32 0.0, %v2480
        %v2482 = vpop.f32.mrb[0].mxu0
        %2483 = vmatprep.mubr.bf16.mxu0 0
        %2484 = vmatmul.mubr.bf16.gmra.mrb[0].mxu0 %v2266
        %v2485 = vpop.f32.mrb[0].mxu0
        %v2486 = vadd.f32 0.0, %v2485
        %v2487 = vpop.f32.mrb[0].mxu0
        %v2488 = vpop.f32.mrb[0].mxu0
        %v2489 = vadd.f32 0.0, %v2488
        %v2490 = vpop.f32.mrb[0].mxu0
        %2491 = vdwg.mxu0
        %v2492 = vlaneseq
        %v2493 = vshrl.u32 %v2492, 7
        %v2494 = vsub.s32 3, %v2493
        %v2495 = vrot.slane %v231, %v2494
        %v2496 = vmul.f32 %v2366, %v2495
        %v2497 = vmul.f32 %v2369, %v2495
        %v2498 = vmul.f32 %v2374, %v2495
        %v2499 = vmul.f32 %v2377, %v2495
        %v2500 = vmul.f32 %v2382, %v2495
        %v2501 = vmul.f32 %v2385, %v2495
        %v2502 = vmul.f32 %v2390, %v2495
        %v2503 = vmul.f32 %v2393, %v2495
        %v2504 = vmul.f32 %v2398, %v2495
        %v2505 = vmul.f32 %v2401, %v2495
        %v2506 = vmul.f32 %v2406, %v2495
        %v2507 = vmul.f32 %v2409, %v2495
        %v2508 = vmul.f32 %v2414, %v2495
        %v2509 = vmul.f32 %v2417, %v2495
        %v2510 = vmul.f32 %v2422, %v2495
        %v2511 = vmul.f32 %v2425, %v2495
        %v2512 = vmul.f32 %v2430, %v2495
        %v2513 = vmul.f32 %v2433, %v2495
        %v2514 = vmul.f32 %v2438, %v2495
        %v2515 = vmul.f32 %v2441, %v2495
        %v2516 = vmul.f32 %v2446, %v2495
        %v2517 = vmul.f32 %v2449, %v2495
        %v2518 = vmul.f32 %v2454, %v2495
        %v2519 = vmul.f32 %v2457, %v2495
        %v2520 = vmul.f32 %v2462, %v2495
        %v2521 = vmul.f32 %v2465, %v2495
        %v2522 = vmul.f32 %v2470, %v2495
        %v2523 = vmul.f32 %v2473, %v2495
        %v2524 = vmul.f32 %v2478, %v2495
        %v2525 = vmul.f32 %v2481, %v2495
        %v2526 = vmul.f32 %v2486, %v2495
        %v2527 = vmul.f32 %v2489, %v2495
        %v2528 = vadd.f32 %v2496, %v2219
        %v2529 = vadd.f32 %v2497, %v2220
        %v2530 = vadd.f32 %v2498, %v2221
        %v2531 = vadd.f32 %v2499, %v2222
        %v2532 = vadd.f32 %v2500, %v2223
        %v2533 = vadd.f32 %v2501, %v2224
        %v2534 = vadd.f32 %v2502, %v2225
        %v2535 = vadd.f32 %v2503, %v2226
        %v2536 = vadd.f32 %v2504, %v2227
        %v2537 = vadd.f32 %v2505, %v2228
        %v2538 = vadd.f32 %v2506, %v2229
        %v2539 = vadd.f32 %v2507, %v2230
        %v2540 = vadd.f32 %v2508, %v2231
        %v2541 = vadd.f32 %v2509, %v2232
        %v2542 = vadd.f32 %v2510, %v2233
        %v2543 = vadd.f32 %v2511, %v2234
        %v2544 = vadd.f32 %v2512, %v2235
        %v2545 = vadd.f32 %v2513, %v2236
        %v2546 = vadd.f32 %v2514, %v2237
        %v2547 = vadd.f32 %v2515, %v2238
        %v2548 = vadd.f32 %v2516, %v2239
        %v2549 = vadd.f32 %v2517, %v2240
        %v2550 = vadd.f32 %v2518, %v2241
        %v2551 = vadd.f32 %v2519, %v2242
        %v2552 = vadd.f32 %v2520, %v2243
        %v2553 = vadd.f32 %v2521, %v2244
        %v2554 = vadd.f32 %v2522, %v2245
        %v2555 = vadd.f32 %v2523, %v2246
        %v2556 = vadd.f32 %v2524, %v2247
        %v2557 = vadd.f32 %v2525, %v2248
        %v2558 = vadd.f32 %v2526, %v2249
        %v2559 = vadd.f32 %v2527, %v2250
        %v2560 = vlaneseq
        %v2561 = vshrl.u32 %v2560, 7
        %v2562 = vsub.s32 4, %v2561
        %v2563 = vrot.slane %v231, %v2562
        %v2564 = vadd.f32 %v2528, %v2563
        %v2565 = vadd.f32 %v2529, %v2563
        %v2566 = vadd.f32 %v2530, %v2563
        %v2567 = vadd.f32 %v2531, %v2563
        %v2568 = vadd.f32 %v2532, %v2563
        %v2569 = vadd.f32 %v2533, %v2563
        %v2570 = vadd.f32 %v2534, %v2563
        %v2571 = vadd.f32 %v2535, %v2563
        %v2572 = vadd.f32 %v2536, %v2563
        %v2573 = vadd.f32 %v2537, %v2563
        %v2574 = vadd.f32 %v2538, %v2563
        %v2575 = vadd.f32 %v2539, %v2563
        %v2576 = vadd.f32 %v2540, %v2563
        %v2577 = vadd.f32 %v2541, %v2563
        %v2578 = vadd.f32 %v2542, %v2563
        %v2579 = vadd.f32 %v2543, %v2563
        %v2580 = vadd.f32 %v2544, %v2563
        %v2581 = vadd.f32 %v2545, %v2563
        %v2582 = vadd.f32 %v2546, %v2563
        %v2583 = vadd.f32 %v2547, %v2563
        %v2584 = vadd.f32 %v2548, %v2563
        %v2585 = vadd.f32 %v2549, %v2563
        %v2586 = vadd.f32 %v2550, %v2563
        %v2587 = vadd.f32 %v2551, %v2563
        %v2588 = vadd.f32 %v2552, %v2563
        %v2589 = vadd.f32 %v2553, %v2563
        %v2590 = vadd.f32 %v2554, %v2563
        %v2591 = vadd.f32 %v2555, %v2563
        %v2592 = vadd.f32 %v2556, %v2563
        %v2593 = vadd.f32 %v2557, %v2563
        %v2594 = vadd.f32 %v2558, %v2563
        %v2595 = vadd.f32 %v2559, %v2563
        %vm2596 = vcmp.ge.f32.partialorder %v2564, 0.0
        %vm2597 = vcmp.ge.f32.partialorder %v2565, 0.0
        %vm2598 = vcmp.ge.f32.partialorder %v2566, 0.0
        %vm2599 = vcmp.ge.f32.partialorder %v2567, 0.0
        %vm2600 = vcmp.ge.f32.partialorder %v2568, 0.0
        %vm2601 = vcmp.ge.f32.partialorder %v2569, 0.0
        %vm2602 = vcmp.ge.f32.partialorder %v2570, 0.0
        %vm2603 = vcmp.ge.f32.partialorder %v2571, 0.0
        %vm2604 = vcmp.ge.f32.partialorder %v2572, 0.0
        %vm2605 = vcmp.ge.f32.partialorder %v2573, 0.0
        %vm2606 = vcmp.ge.f32.partialorder %v2574, 0.0
        %vm2607 = vcmp.ge.f32.partialorder %v2575, 0.0
        %vm2608 = vcmp.ge.f32.partialorder %v2576, 0.0
        %vm2609 = vcmp.ge.f32.partialorder %v2577, 0.0
        %vm2610 = vcmp.ge.f32.partialorder %v2578, 0.0
        %vm2611 = vcmp.ge.f32.partialorder %v2579, 0.0
        %vm2612 = vcmp.ge.f32.partialorder %v2580, 0.0
        %vm2613 = vcmp.ge.f32.partialorder %v2581, 0.0
        %vm2614 = vcmp.ge.f32.partialorder %v2582, 0.0
        %vm2615 = vcmp.ge.f32.partialorder %v2583, 0.0
        %vm2616 = vcmp.ge.f32.partialorder %v2584, 0.0
        %vm2617 = vcmp.ge.f32.partialorder %v2585, 0.0
        %vm2618 = vcmp.ge.f32.partialorder %v2586, 0.0
        %vm2619 = vcmp.ge.f32.partialorder %v2587, 0.0
        %vm2620 = vcmp.ge.f32.partialorder %v2588, 0.0
        %vm2621 = vcmp.ge.f32.partialorder %v2589, 0.0
        %vm2622 = vcmp.ge.f32.partialorder %v2590, 0.0
        %vm2623 = vcmp.ge.f32.partialorder %v2591, 0.0
        %vm2624 = vcmp.ge.f32.partialorder %v2592, 0.0
        %vm2625 = vcmp.ge.f32.partialorder %v2593, 0.0
        %vm2626 = vcmp.ge.f32.partialorder %v2594, 0.0
        %vm2627 = vcmp.ge.f32.partialorder %v2595, 0.0
        %v2628 = vlaneseq
        %v2629 = vshrl.u32 %v2628, 7
        %v2630 = vsub.s32 5, %v2629
        %v2631 = vrot.slane %v231, %v2630
        %v2632 = vmul.f32 %v2631, %v2564
        %v2633 = vmul.f32 %v2631, %v2565
        %v2634 = vmul.f32 %v2631, %v2566
        %v2635 = vmul.f32 %v2631, %v2567
        %v2636 = vmul.f32 %v2631, %v2568
        %v2637 = vmul.f32 %v2631, %v2569
        %v2638 = vmul.f32 %v2631, %v2570
        %v2639 = vmul.f32 %v2631, %v2571
        %v2640 = vmul.f32 %v2631, %v2572
        %v2641 = vmul.f32 %v2631, %v2573
        %v2642 = vmul.f32 %v2631, %v2574
        %v2643 = vmul.f32 %v2631, %v2575
        %v2644 = vmul.f32 %v2631, %v2576
        %v2645 = vmul.f32 %v2631, %v2577
        %v2646 = vmul.f32 %v2631, %v2578
        %v2647 = vmul.f32 %v2631, %v2579
        %v2648 = vmul.f32 %v2631, %v2580
        %v2649 = vmul.f32 %v2631, %v2581
        %v2650 = vmul.f32 %v2631, %v2582
        %v2651 = vmul.f32 %v2631, %v2583
        %v2652 = vmul.f32 %v2631, %v2584
        %v2653 = vmul.f32 %v2631, %v2585
        %v2654 = vmul.f32 %v2631, %v2586
        %v2655 = vmul.f32 %v2631, %v2587
        %v2656 = vmul.f32 %v2631, %v2588
        %v2657 = vmul.f32 %v2631, %v2589
        %v2658 = vmul.f32 %v2631, %v2590
        %v2659 = vmul.f32 %v2631, %v2591
        %v2660 = vmul.f32 %v2631, %v2592
        %v2661 = vmul.f32 %v2631, %v2593
        %v2662 = vmul.f32 %v2631, %v2594
        %v2663 = vmul.f32 %v2631, %v2595
        %v2664 = vsel %vm2596, %v2564, %v2632
        %v2665 = vsel %vm2597, %v2565, %v2633
        %v2666 = vsel %vm2598, %v2566, %v2634
        %v2667 = vsel %vm2599, %v2567, %v2635
        %v2668 = vsel %vm2600, %v2568, %v2636
        %v2669 = vsel %vm2601, %v2569, %v2637
        %v2670 = vsel %vm2602, %v2570, %v2638
        %v2671 = vsel %vm2603, %v2571, %v2639
        %v2672 = vsel %vm2604, %v2572, %v2640
        %v2673 = vsel %vm2605, %v2573, %v2641
        %v2674 = vsel %vm2606, %v2574, %v2642
        %v2675 = vsel %vm2607, %v2575, %v2643
        %v2676 = vsel %vm2608, %v2576, %v2644
        %v2677 = vsel %vm2609, %v2577, %v2645
        %v2678 = vsel %vm2610, %v2578, %v2646
        %v2679 = vsel %vm2611, %v2579, %v2647
        %v2680 = vsel %vm2612, %v2580, %v2648
        %v2681 = vsel %vm2613, %v2581, %v2649
        %v2682 = vsel %vm2614, %v2582, %v2650
        %v2683 = vsel %vm2615, %v2583, %v2651
        %v2684 = vsel %vm2616, %v2584, %v2652
        %v2685 = vsel %vm2617, %v2585, %v2653
        %v2686 = vsel %vm2618, %v2586, %v2654
        %v2687 = vsel %vm2619, %v2587, %v2655
        %v2688 = vsel %vm2620, %v2588, %v2656
        %v2689 = vsel %vm2621, %v2589, %v2657
        %v2690 = vsel %vm2622, %v2590, %v2658
        %v2691 = vsel %vm2623, %v2591, %v2659
        %v2692 = vsel %vm2624, %v2592, %v2660
        %v2693 = vsel %vm2625, %v2593, %v2661
        %v2694 = vsel %vm2626, %v2594, %v2662
        %v2695 = vsel %vm2627, %v2595, %v2663
        %v2696 = vlaneseq
        %v2697 = vshrl.u32 %v2696, 7
        %v2698 = vsub.s32 6, %v2697
        %v2699 = vrot.slane %v231, %v2698
        %v2700 = vadd.f32 %v2664, %v2699
        %v2701 = vadd.f32 %v2665, %v2699
        %v2702 = vadd.f32 %v2666, %v2699
        %v2703 = vadd.f32 %v2667, %v2699
        %v2704 = vadd.f32 %v2668, %v2699
        %v2705 = vadd.f32 %v2669, %v2699
        %v2706 = vadd.f32 %v2670, %v2699
        %v2707 = vadd.f32 %v2671, %v2699
        %v2708 = vadd.f32 %v2672, %v2699
        %v2709 = vadd.f32 %v2673, %v2699
        %v2710 = vadd.f32 %v2674, %v2699
        %v2711 = vadd.f32 %v2675, %v2699
        %v2712 = vadd.f32 %v2676, %v2699
        %v2713 = vadd.f32 %v2677, %v2699
        %v2714 = vadd.f32 %v2678, %v2699
        %v2715 = vadd.f32 %v2679, %v2699
        %v2716 = vadd.f32 %v2680, %v2699
        %v2717 = vadd.f32 %v2681, %v2699
        %v2718 = vadd.f32 %v2682, %v2699
        %v2719 = vadd.f32 %v2683, %v2699
        %v2720 = vadd.f32 %v2684, %v2699
        %v2721 = vadd.f32 %v2685, %v2699
        %v2722 = vadd.f32 %v2686, %v2699
        %v2723 = vadd.f32 %v2687, %v2699
        %v2724 = vadd.f32 %v2688, %v2699
        %v2725 = vadd.f32 %v2689, %v2699
        %v2726 = vadd.f32 %v2690, %v2699
        %v2727 = vadd.f32 %v2691, %v2699
        %v2728 = vadd.f32 %v2692, %v2699
        %v2729 = vadd.f32 %v2693, %v2699
        %v2730 = vadd.f32 %v2694, %v2699
        %v2731 = vadd.f32 %v2695, %v2699
        %2732 = vst [vmem:[%s217] sm:$0xff] %v2700
        %2733 = vst [vmem:[%s217 + $0x8] sm:$0xff] %v2701
        %2734 = vst [vmem:[%s217 + $0x10] sm:$0xff] %v2702
        %2735 = vst [vmem:[%s217 + $0x18] sm:$0xff] %v2703
        %2736 = vst [vmem:[%s217 + $0x20] sm:$0xff] %v2704
        %2737 = vst [vmem:[%s217 + $0x28] sm:$0xff] %v2705
        %2738 = vst [vmem:[%s217 + $0x30] sm:$0xff] %v2706
        %2739 = vst [vmem:[%s217 + $0x38] sm:$0xff] %v2707
        %2740 = vst [vmem:[%s217 + $0x40] sm:$0xff] %v2708
        %2741 = vst [vmem:[%s217 + $0x48] sm:$0xff] %v2709
        %2742 = vst [vmem:[%s217 + $0x50] sm:$0xff] %v2710
        %2743 = vst [vmem:[%s217 + $0x58] sm:$0xff] %v2711
        %2744 = vst [vmem:[%s217 + $0x60] sm:$0xff] %v2712
        %2745 = vst [vmem:[%s217 + $0x68] sm:$0xff] %v2713
        %2746 = vst [vmem:[%s217 + $0x70] sm:$0xff] %v2714
        %2747 = vst [vmem:[%s217 + $0x78] sm:$0xff] %v2715
        %2748 = vst [vmem:[%s217 + $0x80] sm:$0xff] %v2716
        %2749 = vst [vmem:[%s217 + $0x88] sm:$0xff] %v2717
        %2750 = vst [vmem:[%s217 + $0x90] sm:$0xff] %v2718
        %2751 = vst [vmem:[%s217 + $0x98] sm:$0xff] %v2719
        %2752 = vst [vmem:[%s217 + $0xa0] sm:$0xff] %v2720
        %2753 = vst [vmem:[%s217 + $0xa8] sm:$0xff] %v2721
        %2754 = vst [vmem:[%s217 + $0xb0] sm:$0xff] %v2722
        %2755 = vst [vmem:[%s217 + $0xb8] sm:$0xff] %v2723
        %2756 = vst [vmem:[%s217 + $0xc0] sm:$0xff] %v2724
        %2757 = vst [vmem:[%s217 + $0xc8] sm:$0xff] %v2725
        %2758 = vst [vmem:[%s217 + $0xd0] sm:$0xff] %v2726
        %2759 = vst [vmem:[%s217 + $0xd8] sm:$0xff] %v2727
        %2760 = vst [vmem:[%s217 + $0xe0] sm:$0xff] %v2728
        %2761 = vst [vmem:[%s217 + $0xe8] sm:$0xff] %v2729
        %2762 = vst [vmem:[%s217 + $0xf0] sm:$0xff] %v2730
        %2763 = vst [vmem:[%s217 + $0xf8] sm:$0xff] %v2731
        %s2764 = sand.u32 %s131, 1
        %s2765 = scalar_lea.sflag [#allocation3], %s2764
        %s2766 = sand.u32 %s131, 1
        %s2767 = smul.addr %s2766, 256
        %s2768 = scalar_lea.vmem [#allocation2], %s2767
        // Predicated region
        $region37: #{tpu_custom_call.1} parent=35 // pred_check
          %p2769 = pneg %p141
        $region38: #{tpu_custom_call.1} parent=35 // pred_check_branch
          %2771 = sbr.rel (%p2769) target = $region40
        $region39: #{tpu_custom_call.1} parent=35 // pred_region
          %s2772 = smul.u32 16, %s23
          %s2774 = ssub.s32 4096, 4096
          %2775 = vsyncadd %s2765, %s2774
          %s2776 = smul.addr %s2772, 2
          %s2777 = smul.addr %s22, 32
          %s2778 = sadd.s32 %s2776, %s2777
          %s2779 = smul.addr %s2778, 128
          %s2780 = scalar_lea.hbm %s4, %s2779
          %s2781 = sshll.u32 %s2768, 4
          %s2782 = int_to_ptr.vmem [resolvable:$true] %s2781
          %2787 = dma.vmem_to_hbm [thread:$0]  %s2782, 4096, %s2780, %s2765, 128, 128, 8
        $region40: #{tpu_custom_call.1} parent=35 // pred_fallthru
          _
      $region36: #{tpu_custom_call.1} parent=5 // pred_fallthru
        _
      %p2788 = scmp.le.s32.totalorder 2, %s13
      // Predicated region
      $region41: #{tpu_custom_call.1} parent=5 // pred_check
        %p2789 = pneg %p2788
      $region42: #{tpu_custom_call.1} parent=5 // pred_check_branch
        %2791 = sbr.rel (%p2789) target = $region44
      $region43: #{tpu_custom_call.1} parent=5 // pred_region
        %s2792 = ssub.s32 %s13, 2
        // Predicated region
        $region45: #{tpu_custom_call.1} parent=43 // pred_check
          %p2793 = pneg %p147
        $region46: #{tpu_custom_call.1} parent=43 // pred_check_branch
          %2795 = sbr.rel (%p2793) target = $region48
        $region47: #{tpu_custom_call.1} parent=43 // pred_region
          %s2796 = sand.u32 %s132, 1
          %s2797 = scalar_lea.sflag [#allocation3], %s2796
          %s2798 = sand.u32 %s132, 1
          %s2799 = smul.addr %s2798, 256
          %s2800 = scalar_lea.vmem [#allocation2], %s2799
          %2801 = dma.done %s2797, 4096
        $region48: #{tpu_custom_call.1} parent=43 // pred_fallthru
          _
      $region44: #{tpu_custom_call.1} parent=5 // pred_fallthru
        _
    $region6: #{tpu_custom_call.1} parent=1 // loop_footer
      %s17 = sadd.s32 1, %s13
    $region7: #{tpu_custom_call.1} parent=1 // loop_footer_branch
      %12 = sbr.rel target = $region3
    $region8: #{tpu_custom_call.1} parent=1 // loop_exit
      _
    %2802 = vsyncpa [#allocation3], 1
    %s2803 = scalar_lea.sflag [#allocation3], 1
    %2804 = vsyncpa %s2803, 1

</llo_original>
